<compile_context>
chip_gen: v5e
topology: v5e:2x2
jax: 0.10.0
libtpu: 0.0.40
codegen_flags: <defaults>
</compile_context>

<pallas_src>
import jax
import jax.numpy as jnp
from jax.experimental import pallas as pl
from jax.experimental.pallas import tpu as pltpu

NEG_INF = -1e30


def _round_up(x, m):
    return ((x + m - 1) // m) * m


# ----------------------------- fused decoder-step kernel -----------------------------
def decoder_step_kernel(lens_ref, emb_ref, enc_ref, s_ref,
                        wae_ref, waenc_ref, ba_ref, va_ref,
                        wih_ref, whh_ref, bih_ref, bhh_ref,
                        wout_ref, bout_ref,
                        probs_ref, hid_ref):
    B, T, Dp = enc_ref.shape          # Dp = 2*H padded to a multiple of 128
    Hp = hid_ref.shape[-1]            # H padded to a multiple of 128

    emb = emb_ref[...]                # [B, Ep] f32 (pad lanes are 0)
    enc = enc_ref[...]                # [B, T, Dp] f32 (pad lanes / pad timesteps are 0)
    s = s_ref[...]                    # [B, Hp] f32 (pad lanes are 0)
    emb_bf = emb.astype(jnp.bfloat16)
    s_bf = s.astype(jnp.bfloat16)

    # ---------------- additive attention over encoder outputs (length-masked) ----------------
    # TODO(synk): the `attention` submodule is external to this spec; a standard additive
    #             (Bahdanau) attention with length masking is implemented here.
    e_emb = jnp.dot(emb_bf, wae_ref[...], preferred_element_type=jnp.float32)      # [B, Ha]
    enc2d = enc.reshape(B * T, Dp).astype(jnp.bfloat16)                            # one 2-D matmul
    e_enc = jnp.dot(enc2d, waenc_ref[...], preferred_element_type=jnp.float32)     # [B*T, Ha]
    e_enc = e_enc.reshape(B, T, e_enc.shape[-1])                                   # [B, T, Ha]
    energy = jnp.tanh(e_enc + e_emb[:, None, :] + ba_ref[...])                     # [B, T, Ha]
    scores = jnp.sum(energy * va_ref[...], axis=-1, keepdims=True)                 # [B, T, 1]

    lens = jnp.maximum(lens_ref[...], 1)                                           # [B, 1, 1]; len==0 guard
    t_idx = jax.lax.broadcasted_iota(jnp.int32, (B, T, 1), 1)
    scores = jnp.where(t_idx < lens, scores, NEG_INF)                              # mask padding steps
    scores = scores - jnp.max(scores, axis=1, keepdims=True)
    ew = jnp.exp(scores)
    attn = ew * pl.reciprocal(jnp.sum(ew, axis=1, keepdims=True), approx=True)     # [B, T, 1] f32

    # ---------------- context c = sum_t attn * enc  (VPU weighted sum, f32) ----------------
    c = jnp.sum(attn * enc, axis=1, keepdims=True)[:, 0, :]                        # [B, Dp] f32
    c_bf = c.astype(jnp.bfloat16)

    # ---------------- GRU cell (PyTorch gate order r, z, n), 2 fused matmuls ----------------
    x_in = jnp.concatenate([emb_bf, c_bf], axis=-1)                                # [B, Ep+Dp] (128-aligned)
    gi = jnp.dot(x_in, wih_ref[...], preferred_element_type=jnp.float32) + bih_ref[...]   # [B, 3*Hp]
    gh = jnp.dot(s_bf, whh_ref[...], preferred_element_type=jnp.float32) + bhh_ref[...]   # [B, 3*Hp]
    r = jax.nn.sigmoid(gi[:, 0:Hp] + gh[:, 0:Hp])
    z = jax.nn.sigmoid(gi[:, Hp:2 * Hp] + gh[:, Hp:2 * Hp])
    n = jnp.tanh(gi[:, 2 * Hp:] + r * gh[:, 2 * Hp:])
    h = (1.0 - z) * n + z * s                                                      # [B, Hp]; pad lanes stay 0

    # ---------------- output projection on cat(h, c, embedded): ONE matmul + softmax ----------------
    x_out = jnp.concatenate([h.astype(jnp.bfloat16), c_bf, emb_bf], axis=-1)       # [B, Hp+Dp+Ep]
    logits = (jnp.dot(x_out, wout_ref[...], preferred_element_type=jnp.float32)
              + bout_ref[...])                                                     # [B, Vp]; pad bias = -1e30
    logits = logits - jnp.max(logits, axis=-1, keepdims=True)
    ex = jnp.exp(logits)
    probs_ref[...] = (ex / jnp.sum(ex, axis=-1, keepdims=True)).astype(probs_ref.dtype)
    hid_ref[...] = h.astype(hid_ref.dtype)


# ----------------------------- wrapper -----------------------------
@jax.jit
def decoder_forward(params, dec_input, s, enc_output, text_lengths):
    """dec_input: [B] int32 ids; s: [B, H]; enc_output: [B, T, 2H]; text_lengths: [B]."""
    B = dec_input.shape[0]
    T = enc_output.shape[1]
    H = s.shape[-1]
    D = enc_output.shape[-1]
    V, E = params["embedding"].shape
    Ep = params["wae"].shape[0]
    Dp = params["waenc"].shape[0]
    Hp = params["whh"].shape[0]
    Vp = params["bout"].shape[-1]

    # dec_input.unsqueeze(1) -> embedding -> dropout
    embedded = jnp.take(params["embedding"], dec_input, axis=0)          # [B, E]
    # TODO(synk): nn.Dropout is the identity in eval mode; training-time Bernoulli masking not implemented.

    # Pad batch to sublane multiple (8) and T to a multiple of 8; pad feature dims to 128 lanes
    # so all in-kernel concatenations / gate slices are tile-aligned and outputs are lane-dense.
    Bp = max(8, _round_up(B, 8))
    Tp = _round_up(T, 8)
    emb_p = jnp.pad(embedded, ((0, Bp - B), (0, Ep - E)))
    enc_p = jnp.pad(enc_output.astype(jnp.float32), ((0, Bp - B), (0, Tp - T), (0, Dp - D)))
    s_p = jnp.pad(s.astype(jnp.float32), ((0, Bp - B), (0, Hp - H)))
    # Lengths stay as a tiny int32 VMEM tile: the [B, T] validity mask needs a vector operand,
    # so a single (8,128)-padded tile is the cheapest representation. Pad rows get length 1.
    lens_p = jnp.pad(text_lengths.astype(jnp.int32), (0, Bp - B), constant_values=1)[:, None, None]

    # Derive VMEM budget from the actual resident bytes (with headroom) instead of hardcoding.
    def _nb(a):
        return a.size * a.dtype.itemsize
    resident = (_nb(emb_p) + _nb(enc_p) + _nb(s_p) + _nb(lens_p)
                + sum(_nb(params[k]) for k in ("wae", "waenc", "b_attn", "v_attn",
                                               "wih", "whh", "bih", "bhh", "wout", "bout"))
                + Bp * Vp * 4 + Bp * Hp * 4)
    vmem_limit = int(min(max(2 * resident + (16 << 20), 32 << 20), 100 << 20))

    probs_p, hid_p = pl.pallas_call(
        decoder_step_kernel,
        out_shape=(jax.ShapeDtypeStruct((Bp, Vp), jnp.float32),
                   jax.ShapeDtypeStruct((Bp, Hp), jnp.float32)),
        compiler_params=pltpu.CompilerParams(vmem_limit_bytes=vmem_limit),
    )(lens_p, emb_p, enc_p, s_p,
      params["wae"], params["waenc"], params["b_attn"], params["v_attn"],
      params["wih"], params["whh"], params["bih"], params["bhh"],
      params["wout"], params["bout"])

    return probs_p[:B, :V], hid_p[:B, :H]


# ----------------------------- parameter init (deterministic, synthetic) -----------------------------
def init_params(key, vocab_size, emb_size, hidden_size):
    E, H, V = emb_size, hidden_size, vocab_size
    D = 2 * H
    Ep, Dp, Hp, Vp = _round_up(E, 128), _round_up(D, 128), _round_up(H, 128), _round_up(V, 128)
    p = {}

    key, k = jax.random.split(key)
    p["embedding"] = jax.random.normal(k, (V, E), jnp.float32)

    # additive attention: Linear(E + 2H -> H) with bias, and v: Linear(H -> 1, bias=False)
    ka = 1.0 / float(E + D) ** 0.5
    key, k1, k2, k3 = jax.random.split(key, 4)
    w_attn = jax.random.uniform(k1, (H, E + D), jnp.float32, -ka, ka)    # torch layout [out, in]
    b_attn = jax.random.uniform(k2, (H,), jnp.float32, -ka, ka)
    kv = 1.0 / float(H) ** 0.5
    v_attn = jax.random.uniform(k3, (1, H), jnp.float32, -kv, kv)
    w_attn_t = jnp.transpose(w_attn)                                     # [E+2H, H], transposed once at init
    p["wae"] = jnp.zeros((Ep, H), jnp.float32).at[:E].set(w_attn_t[:E]).astype(jnp.bfloat16)
    p["waenc"] = jnp.zeros((Dp, H), jnp.float32).at[:D].set(w_attn_t[E:]).astype(jnp.bfloat16)
    p["b_attn"] = b_attn[None, :]                                        # [1, H] f32
    p["v_attn"] = v_attn                                                 # [1, H] f32

    # GRU: input = E + 2H, hidden = H, PyTorch gate order (r, z, n).
    # Row blocks packed as [emb(Ep) | c(Dp)]; gate column blocks padded to Hp (=128-aligned slices).
    kg = 1.0 / float(H) ** 0.5
    key, k1, k2, k3, k4 = jax.random.split(key, 5)
    w_ih = jax.random.uniform(k1, (3 * H, E + D), jnp.float32, -kg, kg)
    w_hh = jax.random.uniform(k2, (3 * H, H), jnp.float32, -kg, kg)
    b_ih = jax.random.uniform(k3, (3 * H,), jnp.float32, -kg, kg)
    b_hh = jax.random.uniform(k4, (3 * H,), jnp.float32, -kg, kg)
    w_ih_t, w_hh_t = jnp.transpose(w_ih), jnp.transpose(w_hh)            # [E+2H, 3H], [H, 3H]
    wih = jnp.zeros((Ep + Dp, 3 * Hp), jnp.float32)
    whh = jnp.zeros((Hp, 3 * Hp), jnp.float32)
    bih = jnp.zeros((1, 3 * Hp), jnp.float32)
    bhh = jnp.zeros((1, 3 * Hp), jnp.float32)
    for g in range(3):
        wih = wih.at[:E, g * Hp:g * Hp + H].set(w_ih_t[:E, g * H:(g + 1) * H])
        wih = wih.at[Ep:Ep + D, g * Hp:g * Hp + H].set(w_ih_t[E:, g * H:(g + 1) * H])
        whh = whh.at[:H, g * Hp:g * Hp + H].set(w_hh_t[:, g * H:(g + 1) * H])
        bih = bih.at[0, g * Hp:g * Hp + H].set(b_ih[g * H:(g + 1) * H])
        bhh = bhh.at[0, g * Hp:g * Hp + H].set(b_hh[g * H:(g + 1) * H])
    p["wih"], p["whh"] = wih.astype(jnp.bfloat16), whh.astype(jnp.bfloat16)
    p["bih"], p["bhh"] = bih, bhh

    # output Linear(E + 3H -> V), torch cat order (dec_output[H], c[2H], embedded[E]).
    # Rows packed as [h(Hp) | c(Dp) | emb(Ep)]; lanes padded to Vp with bias=-1e30 (softmax ignores pads).
    ko = 1.0 / float(E + 3 * H) ** 0.5
    key, k1, k2 = jax.random.split(key, 3)
    w_out = jax.random.uniform(k1, (V, E + 3 * H), jnp.float32, -ko, ko)
    b_out = jax.random.uniform(k2, (V,), jnp.float32, -ko, ko)
    w_out_t = jnp.transpose(w_out)                                       # [E+3H, V]
    wout = jnp.zeros((Hp + Dp + Ep, Vp), jnp.float32)
    wout = wout.at[:H, :V].set(w_out_t[:H])
    wout = wout.at[Hp:Hp + D, :V].set(w_out_t[H:H + D])
    wout = wout.at[Hp + Dp:Hp + Dp + E, :V].set(w_out_t[H + D:])
    p["wout"] = wout.astype(jnp.bfloat16)
    p["bout"] = jnp.full((1, Vp), NEG_INF, jnp.float32).at[0, :V].set(b_out)
    return p


if __name__ == "__main__":
    vocab_size, emb_size, hidden_size = 50, 16, 32
    B, T = 2, 8

    key = jax.random.PRNGKey(0)
    params = init_params(key, vocab_size, emb_size, hidden_size)

    k1 = jax.random.fold_in(jax.random.PRNGKey(0), 1)
    k2 = jax.random.fold_in(jax.random.PRNGKey(0), 2)
    k3 = jax.random.fold_in(jax.random.PRNGKey(0), 3)
    dec_input = jax.random.randint(k1, (B,), 0, vocab_size, dtype=jnp.int32)       # one decode step
    enc_output = jax.random.normal(k2, (B, T, 2 * hidden_size), jnp.float32)       # encoder outputs
    s = jax.random.normal(k3, (B, hidden_size), jnp.float32)                       # decoder hidden
    text_lengths = jnp.array([8, 5], dtype=jnp.int32)

    probs, dec_hidden = decoder_forward(params, dec_input, s, enc_output, text_lengths)
    jax.block_until_ready((probs, dec_hidden))

    assert probs.shape == (B, vocab_size)
    assert dec_hidden.shape == (B, hidden_size)
    assert bool(jnp.all(jnp.abs(jnp.sum(probs, axis=-1) - 1.0) < 1e-3))            # softmax rows sum to 1
    assert bool(jnp.all(jnp.isfinite(dec_hidden)))
    print("KERNEL_OK")
</pallas_src>

<mosaic_0001>
module attributes {stable_mosaic.version = 11 : i64} {
  func.func @decoder_step_kernel(%arg0: memref<8x1x1xi32, #tpu.memory_space<vmem>>, %arg1: memref<8x128xf32, #tpu.memory_space<vmem>>, %arg2: memref<8x8x128xf32, #tpu.memory_space<vmem>>, %arg3: memref<8x128xf32, #tpu.memory_space<vmem>>, %arg4: memref<128x32xbf16, #tpu.memory_space<vmem>>, %arg5: memref<128x32xbf16, #tpu.memory_space<vmem>>, %arg6: memref<1x32xf32, #tpu.memory_space<vmem>>, %arg7: memref<1x32xf32, #tpu.memory_space<vmem>>, %arg8: memref<256x384xbf16, #tpu.memory_space<vmem>>, %arg9: memref<128x384xbf16, #tpu.memory_space<vmem>>, %arg10: memref<1x384xf32, #tpu.memory_space<vmem>>, %arg11: memref<1x384xf32, #tpu.memory_space<vmem>>, %arg12: memref<384x128xbf16, #tpu.memory_space<vmem>>, %arg13: memref<1x128xf32, #tpu.memory_space<vmem>>, %arg14: memref<8x128xf32, #tpu.memory_space<vmem>>, %arg15: memref<8x128xf32, #tpu.memory_space<vmem>>) attributes {dimension_semantics = [], scalar_prefetch = 0 : i64, scratch_operands = 0 : i64, tpu.core_type = #tpu.core_type<tc>} {
    %c0 = arith.constant 0 : index
    %c0_0 = arith.constant 0 : index
    %0 = vector.load %arg1[%c0, %c0_0] : memref<8x128xf32, #tpu.memory_space<vmem>>, vector<8x128xf32>
    %c0_1 = arith.constant 0 : index
    %c0_2 = arith.constant 0 : index
    %c0_3 = arith.constant 0 : index
    %1 = vector.load %arg2[%c0_1, %c0_2, %c0_3] : memref<8x8x128xf32, #tpu.memory_space<vmem>>, vector<8x8x128xf32>
    %c0_4 = arith.constant 0 : index
    %c0_5 = arith.constant 0 : index
    %2 = vector.load %arg3[%c0_4, %c0_5] : memref<8x128xf32, #tpu.memory_space<vmem>>, vector<8x128xf32>
    %3 = arith.truncf %0 : vector<8x128xf32> to vector<8x128xbf16>
    %4 = arith.truncf %2 : vector<8x128xf32> to vector<8x128xbf16>
    %c0_6 = arith.constant 0 : index
    %c0_7 = arith.constant 0 : index
    %5 = vector.load %arg4[%c0_6, %c0_7] : memref<128x32xbf16, #tpu.memory_space<vmem>>, vector<128x32xbf16>
    %cst = arith.constant dense<0.000000e+00> : vector<8x32xf32>
    %6 = tpu.matmul %3, %5, %cst {dimension_numbers = #tpu.dot_dimension_numbers<[1], [0], [0], [1], [0, 0, 1, 1], [], []>} : vector<8x128xbf16>, vector<128x32xbf16>, vector<8x32xf32> -> vector<8x32xf32>
    %7 = vector.shape_cast %1 : vector<8x8x128xf32> to vector<64x128xf32>
    %8 = arith.truncf %7 : vector<64x128xf32> to vector<64x128xbf16>
    %c0_8 = arith.constant 0 : index
    %c0_9 = arith.constant 0 : index
    %9 = vector.load %arg5[%c0_8, %c0_9] : memref<128x32xbf16, #tpu.memory_space<vmem>>, vector<128x32xbf16>
    %cst_10 = arith.constant dense<0.000000e+00> : vector<64x32xf32>
    %10 = tpu.matmul %8, %9, %cst_10 {dimension_numbers = #tpu.dot_dimension_numbers<[1], [0], [0], [1], [0, 0, 1, 1], [], []>} : vector<64x128xbf16>, vector<128x32xbf16>, vector<64x32xf32> -> vector<64x32xf32>
    %11 = vector.shape_cast %10 : vector<64x32xf32> to vector<8x8x32xf32>
    %12 = vector.shape_cast %6 : vector<8x32xf32> to vector<8x1x32xf32>
    %13 = vector.broadcast %12 : vector<8x1x32xf32> to vector<8x8x32xf32>
    %14 = arith.addf %11, %13 : vector<8x8x32xf32>
    %c0_11 = arith.constant 0 : index
    %c0_12 = arith.constant 0 : index
    %15 = vector.load %arg6[%c0_11, %c0_12] : memref<1x32xf32, #tpu.memory_space<vmem>>, vector<1x32xf32>
    %16 = vector.shape_cast %15 : vector<1x32xf32> to vector<1x1x32xf32>
    %17 = vector.broadcast %16 : vector<1x1x32xf32> to vector<8x8x32xf32>
    %18 = arith.addf %14, %17 : vector<8x8x32xf32>
    %19 = math.tanh %18 : vector<8x8x32xf32>
    %c0_13 = arith.constant 0 : index
    %c0_14 = arith.constant 0 : index
    %20 = vector.load %arg7[%c0_13, %c0_14] : memref<1x32xf32, #tpu.memory_space<vmem>>, vector<1x32xf32>
    %21 = vector.shape_cast %20 : vector<1x32xf32> to vector<1x1x32xf32>
    %22 = vector.broadcast %21 : vector<1x1x32xf32> to vector<8x8x32xf32>
    %23 = arith.mulf %19, %22 : vector<8x8x32xf32>
    %cst_15 = arith.constant dense<0.000000e+00> : vector<8x8xf32>
    %24 = vector.multi_reduction <add>, %23, %cst_15 [2] : vector<8x8x32xf32> to vector<8x8xf32>
    %25 = vector.shape_cast %24 : vector<8x8xf32> to vector<8x8x1xf32>
    %c0_16 = arith.constant 0 : index
    %c0_17 = arith.constant 0 : index
    %c0_18 = arith.constant 0 : index
    %26 = vector.load %arg0[%c0_16, %c0_17, %c0_18] : memref<8x1x1xi32, #tpu.memory_space<vmem>>, vector<8x1x1xi32>
    %c1_i32 = arith.constant 1 : i32
    %27 = vector.broadcast %c1_i32 : i32 to vector<8x1x1xi32>
    %28 = arith.maxsi %26, %27 : vector<8x1x1xi32>
    %29 = tpu.iota {dimensions = array<i32: 1>} : vector<8x8x1xi32>
    %30 = vector.broadcast %28 : vector<8x1x1xi32> to vector<8x8x1xi32>
    %31 = arith.cmpi slt, %29, %30 : vector<8x8x1xi32>
    %cst_19 = arith.constant -1.000000e+30 : f32
    %32 = vector.broadcast %cst_19 : f32 to vector<8x8x1xf32>
    %33 = arith.select %31, %25, %32 : vector<8x8x1xi1>, vector<8x8x1xf32>
    %cst_20 = arith.constant dense<0xFF800000> : vector<8x1xf32>
    %34 = vector.multi_reduction <maximumf>, %33, %cst_20 [1] : vector<8x8x1xf32> to vector<8x1xf32>
    %35 = vector.shape_cast %34 : vector<8x1xf32> to vector<8x1x1xf32>
    %36 = vector.broadcast %35 : vector<8x1x1xf32> to vector<8x8x1xf32>
    %37 = arith.subf %33, %36 : vector<8x8x1xf32>
    %38 = math.exp %37 : vector<8x8x1xf32>
    %cst_21 = arith.constant dense<0.000000e+00> : vector<8x1xf32>
    %39 = vector.multi_reduction <add>, %38, %cst_21 [1] : vector<8x8x1xf32> to vector<8x1xf32>
    %40 = vector.shape_cast %39 : vector<8x1xf32> to vector<8x1x1xf32>
    %41 = tpu.reciprocal %40 {approx = true} : vector<8x1x1xf32> -> vector<8x1x1xf32>
    %42 = vector.broadcast %41 : vector<8x1x1xf32> to vector<8x8x1xf32>
    %43 = arith.mulf %38, %42 : vector<8x8x1xf32>
    %44 = vector.broadcast %43 : vector<8x8x1xf32> to vector<8x8x128xf32>
    %45 = arith.mulf %44, %1 : vector<8x8x128xf32>
    %cst_22 = arith.constant dense<0.000000e+00> : vector<8x128xf32>
    %46 = vector.multi_reduction <add>, %45, %cst_22 [1] : vector<8x8x128xf32> to vector<8x128xf32>
    %47 = vector.shape_cast %46 : vector<8x128xf32> to vector<8x1x128xf32>
    %48 = vector.shape_cast %47 : vector<8x1x128xf32> to vector<8x128xf32>
    %49 = arith.truncf %48 : vector<8x128xf32> to vector<8x128xbf16>
    %50 = tpu.concatenate %3, %49 in 1 : vector<8x128xbf16>, vector<8x128xbf16> -> vector<8x256xbf16>
    %c0_23 = arith.constant 0 : index
    %c0_24 = arith.constant 0 : index
    %51 = vector.load %arg8[%c0_23, %c0_24] : memref<256x384xbf16, #tpu.memory_space<vmem>>, vector<256x384xbf16>
    %cst_25 = arith.constant dense<0.000000e+00> : vector<8x384xf32>
    %52 = tpu.matmul %50, %51, %cst_25 {dimension_numbers = #tpu.dot_dimension_numbers<[1], [0], [0], [1], [0, 0, 1, 1], [], []>} : vector<8x256xbf16>, vector<256x384xbf16>, vector<8x384xf32> -> vector<8x384xf32>
    %c0_26 = arith.constant 0 : index
    %c0_27 = arith.constant 0 : index
    %53 = vector.load %arg10[%c0_26, %c0_27] : memref<1x384xf32, #tpu.memory_space<vmem>>, vector<1x384xf32>
    %54 = vector.broadcast %53 : vector<1x384xf32> to vector<8x384xf32>
    %55 = arith.addf %52, %54 : vector<8x384xf32>
    %c0_28 = arith.constant 0 : index
    %c0_29 = arith.constant 0 : index
    %56 = vector.load %arg9[%c0_28, %c0_29] : memref<128x384xbf16, #tpu.memory_space<vmem>>, vector<128x384xbf16>
    %cst_30 = arith.constant dense<0.000000e+00> : vector<8x384xf32>
    %57 = tpu.matmul %4, %56, %cst_30 {dimension_numbers = #tpu.dot_dimension_numbers<[1], [0], [0], [1], [0, 0, 1, 1], [], []>} : vector<8x128xbf16>, vector<128x384xbf16>, vector<8x384xf32> -> vector<8x384xf32>
    %c0_31 = arith.constant 0 : index
    %c0_32 = arith.constant 0 : index
    %58 = vector.load %arg11[%c0_31, %c0_32] : memref<1x384xf32, #tpu.memory_space<vmem>>, vector<1x384xf32>
    %59 = vector.broadcast %58 : vector<1x384xf32> to vector<8x384xf32>
    %60 = arith.addf %57, %59 : vector<8x384xf32>
    %61 = vector.extract_strided_slice %55 {offsets = [0, 0], sizes = [8, 128], strides = [1, 1]} : vector<8x384xf32> to vector<8x128xf32>
    %62 = vector.extract_strided_slice %60 {offsets = [0, 0], sizes = [8, 128], strides = [1, 1]} : vector<8x384xf32> to vector<8x128xf32>
    %63 = arith.addf %61, %62 : vector<8x128xf32>
    %64 = arith.negf %63 : vector<8x128xf32>
    %65 = math.exp %64 : vector<8x128xf32>
    %cst_33 = arith.constant 1.000000e+00 : f32
    %66 = vector.broadcast %cst_33 : f32 to vector<8x128xf32>
    %67 = arith.addf %66, %65 : vector<8x128xf32>
    %68 = arith.divf %66, %67 : vector<8x128xf32>
    %69 = vector.extract_strided_slice %55 {offsets = [0, 128], sizes = [8, 128], strides = [1, 1]} : vector<8x384xf32> to vector<8x128xf32>
    %70 = vector.extract_strided_slice %60 {offsets = [0, 128], sizes = [8, 128], strides = [1, 1]} : vector<8x384xf32> to vector<8x128xf32>
    %71 = arith.addf %69, %70 : vector<8x128xf32>
    %72 = arith.negf %71 : vector<8x128xf32>
    %73 = math.exp %72 : vector<8x128xf32>
    %cst_34 = arith.constant 1.000000e+00 : f32
    %74 = vector.broadcast %cst_34 : f32 to vector<8x128xf32>
    %75 = arith.addf %74, %73 : vector<8x128xf32>
    %76 = arith.divf %74, %75 : vector<8x128xf32>
    %77 = vector.extract_strided_slice %55 {offsets = [0, 256], sizes = [8, 128], strides = [1, 1]} : vector<8x384xf32> to vector<8x128xf32>
    %78 = vector.extract_strided_slice %60 {offsets = [0, 256], sizes = [8, 128], strides = [1, 1]} : vector<8x384xf32> to vector<8x128xf32>
    %79 = arith.mulf %68, %78 : vector<8x128xf32>
    %80 = arith.addf %77, %79 : vector<8x128xf32>
    %81 = math.tanh %80 : vector<8x128xf32>
    %cst_35 = arith.constant 1.000000e+00 : f32
    %82 = vector.broadcast %cst_35 : f32 to vector<8x128xf32>
    %83 = arith.subf %82, %76 : vector<8x128xf32>
    %84 = arith.mulf %83, %81 : vector<8x128xf32>
    %85 = arith.mulf %76, %2 : vector<8x128xf32>
    %86 = arith.addf %84, %85 : vector<8x128xf32>
    %87 = arith.truncf %86 : vector<8x128xf32> to vector<8x128xbf16>
    %88 = tpu.concatenate %87, %49, %3 in 1 : vector<8x128xbf16>, vector<8x128xbf16>, vector<8x128xbf16> -> vector<8x384xbf16>
    %c0_36 = arith.constant 0 : index
    %c0_37 = arith.constant 0 : index
    %89 = vector.load %arg12[%c0_36, %c0_37] : memref<384x128xbf16, #tpu.memory_space<vmem>>, vector<384x128xbf16>
    %cst_38 = arith.constant dense<0.000000e+00> : vector<8x128xf32>
    %90 = tpu.matmul %88, %89, %cst_38 {dimension_numbers = #tpu.dot_dimension_numbers<[1], [0], [0], [1], [0, 0, 1, 1], [], []>} : vector<8x384xbf16>, vector<384x128xbf16>, vector<8x128xf32> -> vector<8x128xf32>
    %c0_39 = arith.constant 0 : index
    %c0_40 = arith.constant 0 : index
    %91 = vector.load %arg13[%c0_39, %c0_40] : memref<1x128xf32, #tpu.memory_space<vmem>>, vector<1x128xf32>
    %92 = vector.broadcast %91 : vector<1x128xf32> to vector<8x128xf32>
    %93 = arith.addf %90, %92 : vector<8x128xf32>
    %cst_41 = arith.constant dense<0xFF800000> : vector<8xf32>
    %94 = vector.multi_reduction <maximumf>, %93, %cst_41 [1] : vector<8x128xf32> to vector<8xf32>
    %95 = vector.shape_cast %94 : vector<8xf32> to vector<8x1xf32>
    %96 = vector.broadcast %95 : vector<8x1xf32> to vector<8x128xf32>
    %97 = arith.subf %93, %96 : vector<8x128xf32>
    %98 = math.exp %97 : vector<8x128xf32>
    %cst_42 = arith.constant dense<0.000000e+00> : vector<8xf32>
    %99 = vector.multi_reduction <add>, %98, %cst_42 [1] : vector<8x128xf32> to vector<8xf32>
    %100 = vector.shape_cast %99 : vector<8xf32> to vector<8x1xf32>
    %101 = vector.broadcast %100 : vector<8x1xf32> to vector<8x128xf32>
    %102 = arith.divf %98, %101 : vector<8x128xf32>
    %c0_43 = arith.constant 0 : index
    %c0_44 = arith.constant 0 : index
    %103 = vector.load %arg14[%c0_43, %c0_44] : memref<8x128xf32, #tpu.memory_space<vmem>>, vector<8x128xf32>
    tpu.vector_store %arg14[%c0_43, %c0_44], %102 {strides = array<i32>} : memref<8x128xf32, #tpu.memory_space<vmem>>, vector<8x128xf32>,
    %c0_45 = arith.constant 0 : index
    %c0_46 = arith.constant 0 : index
    %104 = vector.load %arg15[%c0_45, %c0_46] : memref<8x128xf32, #tpu.memory_space<vmem>>, vector<8x128xf32>
    tpu.vector_store %arg15[%c0_45, %c0_46], %86 {strides = array<i32>} : memref<8x128xf32, #tpu.memory_space<vmem>>, vector<8x128xf32>,
    return
  }
}

</mosaic_0001>

<llo_original>
// kernel: decoder_forward.1
$region0: #{decoder_forward.1}
  #allocation0 [shape = 'u32[]', space=smem, size = 0x4, offset = 0x4, fixed_abs, tag = 'smem constant byte address 0x4 - core index']
  #allocation1 [shape = 'u32[72,128]{1,0:T(1,128)}', space=vmem, size = 0x9000, scoped, tag = 'internal scratch']
  %s0 = inlined_call_operand.vmem [shape: s32[8,1,1], index: 0, kind: input, shape index: {}]
  %s1 = inlined_call_operand.vmem [shape: f32[8,128], index: 1, kind: input, shape index: {}]
  %s2 = inlined_call_operand.vmem [shape: f32[8,8,128], index: 2, kind: input, shape index: {}]
  %s3 = inlined_call_operand.vmem [shape: f32[8,128], index: 3, kind: input, shape index: {}]
  %s4 = inlined_call_operand.vmem [shape: bf16[128,32], index: 4, kind: input, shape index: {}]
  %s5 = inlined_call_operand.vmem [shape: bf16[128,32], index: 5, kind: input, shape index: {}]
  %s6 = inlined_call_operand.vmem [shape: f32[1,32], index: 6, kind: input, shape index: {}]
  %s7 = inlined_call_operand.vmem [shape: f32[1,32], index: 7, kind: input, shape index: {}]
  %s8 = inlined_call_operand.hbm [shape: bf16[256,384], index: 8, kind: input, shape index: {}]
  %s9 = inlined_call_operand.hbm [shape: bf16[128,384], index: 9, kind: input, shape index: {}]
  %s10 = inlined_call_operand.vmem [shape: f32[1,384], index: 10, kind: input, shape index: {}]
  %s11 = inlined_call_operand.vmem [shape: f32[1,384], index: 11, kind: input, shape index: {}]
  %s12 = inlined_call_operand.hbm [shape: bf16[384,128], index: 12, kind: input, shape index: {}]
  %s13 = inlined_call_operand.vmem [shape: f32[1,128], index: 13, kind: input, shape index: {}]
  %s14 = inlined_call_operand.vmem [shape: f32[8,128], index: 14, kind: output, shape index: {0}]
  %s15 = inlined_call_operand.vmem [shape: f32[8,128], index: 15, kind: output, shape index: {1}]
  %16 = xla_tuple %s14, %s15
  %s17 = sld [smem:[#allocation0]]
  $region86: #{decoder_forward.1} parent=0
    _
  %s19 = ssub.s32 1, %s17
  %s20 = scalar_select 0, %s19, %s17
  $region1: #{decoder_forward.1} parent=0
    #allocation2 [shape = 'u8[196608]{0}', space=vmem, size = 0x30000, scoped, tag = 'input window, operand 8, single buffered']
    #allocation3 [shape = 's32[1]{0}', space=sflag, size = 0x4, scoped, tag = 'scoped memory for decoder_forward.1']
    #allocation4 [shape = 'u8[98304]{0}', space=vmem, size = 0x18000, scoped, tag = 'input window, operand 9, single buffered']
    #allocation5 [shape = 's32[1]{0}', space=sflag, size = 0x4, scoped, tag = 'scoped memory for decoder_forward.1']
    #allocation6 [shape = 'u8[98304]{0}', space=vmem, size = 0x18000, scoped, tag = 'input window, operand 12, single buffered']
    %21 = vsyncpa [#allocation3], 0
    %22 = vsyncpa [#allocation5], 0
    // Predicated region
    $region2: #{decoder_forward.1} parent=1 // pred_check
      _
    $region3: #{decoder_forward.1} parent=1 // pred_check_branch
      %24 = sbr.rel (0) target = $region5
    $region4: #{decoder_forward.1} parent=1 // pred_region
      _
    $region5: #{decoder_forward.1} parent=1 // pred_fallthru
      _
    // Predicated region
    $region6: #{decoder_forward.1} parent=1 // pred_check
      _
    $region7: #{decoder_forward.1} parent=1 // pred_check_branch
      %26 = sbr.rel (0) target = $region9
    $region8: #{decoder_forward.1} parent=1 // pred_region
      _
    $region9: #{decoder_forward.1} parent=1 // pred_fallthru
      _
    // Predicated region
    $region10: #{decoder_forward.1} parent=1 // pred_check
      _
    $region11: #{decoder_forward.1} parent=1 // pred_check_branch
      %28 = sbr.rel (0) target = $region13
    $region12: #{decoder_forward.1} parent=1 // pred_region
      _
    $region13: #{decoder_forward.1} parent=1 // pred_fallthru
      _
    // Predicated region
    $region14: #{decoder_forward.1} parent=1 // pred_check
      _
    $region15: #{decoder_forward.1} parent=1 // pred_check_branch
      %30 = sbr.rel (0) target = $region17
    $region16: #{decoder_forward.1} parent=1 // pred_region
      _
    $region17: #{decoder_forward.1} parent=1 // pred_fallthru
      _
    // Predicated region
    $region18: #{decoder_forward.1} parent=1 // pred_check
      _
    $region19: #{decoder_forward.1} parent=1 // pred_check_branch
      %32 = sbr.rel (0) target = $region21
    $region20: #{decoder_forward.1} parent=1 // pred_region
      _
    $region21: #{decoder_forward.1} parent=1 // pred_fallthru
      _
    // Predicated region
    $region22: #{decoder_forward.1} parent=1 // pred_check
      _
    $region23: #{decoder_forward.1} parent=1 // pred_check_branch
      %34 = sbr.rel (0) target = $region25
    $region24: #{decoder_forward.1} parent=1 // pred_region
      _
    $region25: #{decoder_forward.1} parent=1 // pred_fallthru
      _
    // Predicated region
    $region26: #{decoder_forward.1} parent=1 // pred_check
      _
    $region27: #{decoder_forward.1} parent=1 // pred_check_branch
      %36 = sbr.rel (0) target = $region29
    $region28: #{decoder_forward.1} parent=1 // pred_region
      _
    $region29: #{decoder_forward.1} parent=1 // pred_fallthru
      _
    // Predicated region
    $region30: #{decoder_forward.1} parent=1 // pred_check
      _
    $region31: #{decoder_forward.1} parent=1 // pred_check_branch
      %38 = sbr.rel (0) target = $region33
    $region32: #{decoder_forward.1} parent=1 // pred_region
      _
    $region33: #{decoder_forward.1} parent=1 // pred_fallthru
      _
    // Predicated region
    $region34: #{decoder_forward.1} parent=1 // pred_check
      _
    $region35: #{decoder_forward.1} parent=1 // pred_check_branch
      %40 = sbr.rel (0) target = $region37
    $region36: #{decoder_forward.1} parent=1 // pred_region
      %42 = vsyncadd [#allocation3], 0
      %s43 = sshll.u32 %s8, 4
      %s44 = int_to_ptr.hbm [resolvable:$true] %s43
      %s45 = sshll.u32 [#allocation2], 4
      %s46 = int_to_ptr.vmem [resolvable:$true] %s45
      %51 = dma.hbm_to_vmem [thread:$0]  %s44, 6144, %s46, [#allocation3], 192, 192, 12
    $region37: #{decoder_forward.1} parent=1 // pred_fallthru
      _
    // Predicated region
    $region38: #{decoder_forward.1} parent=1 // pred_check
      _
    $region39: #{decoder_forward.1} parent=1 // pred_check_branch
      %53 = sbr.rel (0) target = $region41
    $region40: #{decoder_forward.1} parent=1 // pred_region
      %55 = vsyncadd [#allocation5], 0
      %s56 = sshll.u32 %s9, 4
      %s57 = int_to_ptr.hbm [resolvable:$true] %s56
      %s58 = sshll.u32 [#allocation4], 4
      %s59 = int_to_ptr.vmem [resolvable:$true] %s58
      %64 = dma.hbm_to_vmem [thread:$0]  %s57, 3072, %s59, [#allocation5], 192, 192, 12
    $region41: #{decoder_forward.1} parent=1 // pred_fallthru
      _
    // Predicated region
    $region42: #{decoder_forward.1} parent=1 // pred_check
      _
    $region43: #{decoder_forward.1} parent=1 // pred_check_branch
      %66 = sbr.rel (0) target = $region45
    $region44: #{decoder_forward.1} parent=1 // pred_region
      _
    $region45: #{decoder_forward.1} parent=1 // pred_fallthru
      _
    // Predicated region
    $region46: #{decoder_forward.1} parent=1 // pred_check
      _
    $region47: #{decoder_forward.1} parent=1 // pred_check_branch
      %68 = sbr.rel (0) target = $region49
    $region48: #{decoder_forward.1} parent=1 // pred_region
      _
    $region49: #{decoder_forward.1} parent=1 // pred_fallthru
      _
    // Predicated region
    $region50: #{decoder_forward.1} parent=1 // pred_check
      _
    $region51: #{decoder_forward.1} parent=1 // pred_check_branch
      %70 = sbr.rel (0) target = $region53
    $region52: #{decoder_forward.1} parent=1 // pred_region
      %72 = vsyncadd [#allocation5], 0
      %s73 = sshll.u32 %s12, 4
      %s74 = int_to_ptr.hbm [resolvable:$true] %s73
      %s75 = sshll.u32 [#allocation6], 4
      %s76 = int_to_ptr.vmem [resolvable:$true] %s75
      %81 = dma.hbm_to_vmem [thread:$0]  %s74, 3072, %s76, [#allocation5], 64, 64, 4
    $region53: #{decoder_forward.1} parent=1 // pred_fallthru
      _
    // Predicated region
    $region54: #{decoder_forward.1} parent=1 // pred_check
      _
    $region55: #{decoder_forward.1} parent=1 // pred_check_branch
      %83 = sbr.rel (0) target = $region57
    $region56: #{decoder_forward.1} parent=1 // pred_region
      _
    $region57: #{decoder_forward.1} parent=1 // pred_fallthru
      _
    // Predicated region
    $region58: #{decoder_forward.1} parent=1 // pred_check
      _
    $region59: #{decoder_forward.1} parent=1 // pred_check_branch
      %85 = sbr.rel (0) target = $region61
    $region60: #{decoder_forward.1} parent=1 // pred_region
      %87 = dma.done [#allocation3], 6144
    $region61: #{decoder_forward.1} parent=1 // pred_fallthru
      _
    // Predicated region
    $region62: #{decoder_forward.1} parent=1 // pred_check
      _
    $region63: #{decoder_forward.1} parent=1 // pred_check_branch
      %89 = sbr.rel (0) target = $region65
    $region64: #{decoder_forward.1} parent=1 // pred_region
      %91 = dma.done [#allocation5], 3072
    $region65: #{decoder_forward.1} parent=1 // pred_fallthru
      _
    // Predicated region
    $region66: #{decoder_forward.1} parent=1 // pred_check
      _
    $region67: #{decoder_forward.1} parent=1 // pred_check_branch
      %93 = sbr.rel (0) target = $region69
    $region68: #{decoder_forward.1} parent=1 // pred_region
      %95 = dma.done [#allocation5], 3072
    $region69: #{decoder_forward.1} parent=1 // pred_fallthru
      _
    %v96 = vld [vmem:[%s1] sm:$0xff]
    %v97 = vld [vmem:[%s2] sm:$0xff]
    %v98 = vld [vmem:[%s2 + $0x8] sm:$0xff]
    %v99 = vld [vmem:[%s2 + $0x10] sm:$0xff]
    %v100 = vld [vmem:[%s2 + $0x18] sm:$0xff]
    %v101 = vld [vmem:[%s2 + $0x20] sm:$0xff]
    %v102 = vld [vmem:[%s2 + $0x28] sm:$0xff]
    %v103 = vld [vmem:[%s2 + $0x30] sm:$0xff]
    %v104 = vld [vmem:[%s2 + $0x38] sm:$0xff]
    %v105 = vld [vmem:[%s3] sm:$0xff]
    %v106 = vpack.c.bf16 %v96, %v96
    %v107 = vpack.c.bf16 %v105, %v105
    %v108 = vld [vmem:[%s4] sm:$0xf]
    %v109 = vld [vmem:[%s4 + $0x4] sm:$0xf]
    %v110 = vld [vmem:[%s4 + $0x8] sm:$0xf]
    %v111 = vld [vmem:[%s4 + $0xc] sm:$0xf]
    %v112 = vld [vmem:[%s4 + $0x10] sm:$0xf]
    %v113 = vld [vmem:[%s4 + $0x14] sm:$0xf]
    %v114 = vld [vmem:[%s4 + $0x18] sm:$0xf]
    %v115 = vld [vmem:[%s4 + $0x1c] sm:$0xf]
    %v116 = vld [vmem:[%s4 + $0x20] sm:$0xf]
    %v117 = vld [vmem:[%s4 + $0x24] sm:$0xf]
    %v118 = vld [vmem:[%s4 + $0x28] sm:$0xf]
    %v119 = vld [vmem:[%s4 + $0x2c] sm:$0xf]
    %v120 = vld [vmem:[%s4 + $0x30] sm:$0xf]
    %v121 = vld [vmem:[%s4 + $0x34] sm:$0xf]
    %v122 = vld [vmem:[%s4 + $0x38] sm:$0xf]
    %v123 = vld [vmem:[%s4 + $0x3c] sm:$0xf]
    %v140 = vunpack.c.l.b16 %v108
    %v141 = vunpack.c.l.b16 %v109
    %v142 = vunpack.c.l.b16 %v110
    %v143 = vunpack.c.l.b16 %v111
    %v144 = vunpack.c.l.b16 %v112
    %v145 = vunpack.c.l.b16 %v113
    %v146 = vunpack.c.l.b16 %v114
    %v147 = vunpack.c.l.b16 %v115
    %v148 = vunpack.c.l.b16 %v116
    %v149 = vunpack.c.l.b16 %v117
    %v150 = vunpack.c.l.b16 %v118
    %v151 = vunpack.c.l.b16 %v119
    %v152 = vunpack.c.l.b16 %v120
    %v153 = vunpack.c.l.b16 %v121
    %v154 = vunpack.c.l.b16 %v122
    %v155 = vunpack.c.l.b16 %v123
    %v156 = vpack.c.b16 %v141, %v140
    %v157 = vpack.c.b16 %v143, %v142
    %v158 = vpack.c.b16 %v145, %v144
    %v159 = vpack.c.b16 %v147, %v146
    %v160 = vpack.c.b16 %v149, %v148
    %v161 = vpack.c.b16 %v151, %v150
    %v162 = vpack.c.b16 %v153, %v152
    %v163 = vpack.c.b16 %v155, %v154
    %172 = vmatpush.bf16.msra.mxu0 %v163
    %173 = vmatpush.bf16.msra.mxu0 %v162
    %174 = vmatpush.bf16.msra.mxu0 %v161
    %175 = vmatpush.bf16.msra.mxu0 %v160
    %176 = vmatpush.bf16.msra.mxu0 %v159
    %177 = vmatpush.bf16.msra.mxu0 %v158
    %178 = vmatpush.bf16.msra.mxu0 %v157
    %179 = vmatpush.bf16.msra.mxu0 %v156
    %180 = vmatmul.bf16.gmra.mxu0 %v106
    %v181 = vpop.f32.mrf.mxu0
    %v182 = vadd.f32 0.0, %v181
    %v183 = vpop.f32.mrf.mxu0
    %184 = vdwg.mxu0
    %v185 = vpack.c.bf16 %v98, %v97
    %v186 = vpack.c.bf16 %v100, %v99
    %v187 = vpack.c.bf16 %v102, %v101
    %v188 = vpack.c.bf16 %v104, %v103
    %v189 = vld [vmem:[%s5] sm:$0xf]
    %v190 = vld [vmem:[%s5 + $0x4] sm:$0xf]
    %v191 = vld [vmem:[%s5 + $0x8] sm:$0xf]
    %v192 = vld [vmem:[%s5 + $0xc] sm:$0xf]
    %v193 = vld [vmem:[%s5 + $0x10] sm:$0xf]
    %v194 = vld [vmem:[%s5 + $0x14] sm:$0xf]
    %v195 = vld [vmem:[%s5 + $0x18] sm:$0xf]
    %v196 = vld [vmem:[%s5 + $0x1c] sm:$0xf]
    %v197 = vld [vmem:[%s5 + $0x20] sm:$0xf]
    %v198 = vld [vmem:[%s5 + $0x24] sm:$0xf]
    %v199 = vld [vmem:[%s5 + $0x28] sm:$0xf]
    %v200 = vld [vmem:[%s5 + $0x2c] sm:$0xf]
    %v201 = vld [vmem:[%s5 + $0x30] sm:$0xf]
    %v202 = vld [vmem:[%s5 + $0x34] sm:$0xf]
    %v203 = vld [vmem:[%s5 + $0x38] sm:$0xf]
    %v204 = vld [vmem:[%s5 + $0x3c] sm:$0xf]
    %v221 = vunpack.c.l.b16 %v189
    %v222 = vunpack.c.l.b16 %v190
    %v223 = vunpack.c.l.b16 %v191
    %v224 = vunpack.c.l.b16 %v192
    %v225 = vunpack.c.l.b16 %v193
    %v226 = vunpack.c.l.b16 %v194
    %v227 = vunpack.c.l.b16 %v195
    %v228 = vunpack.c.l.b16 %v196
    %v229 = vunpack.c.l.b16 %v197
    %v230 = vunpack.c.l.b16 %v198
    %v231 = vunpack.c.l.b16 %v199
    %v232 = vunpack.c.l.b16 %v200
    %v233 = vunpack.c.l.b16 %v201
    %v234 = vunpack.c.l.b16 %v202
    %v235 = vunpack.c.l.b16 %v203
    %v236 = vunpack.c.l.b16 %v204
    %v237 = vpack.c.b16 %v222, %v221
    %v238 = vpack.c.b16 %v224, %v223
    %v239 = vpack.c.b16 %v226, %v225
    %v240 = vpack.c.b16 %v228, %v227
    %v241 = vpack.c.b16 %v230, %v229
    %v242 = vpack.c.b16 %v232, %v231
    %v243 = vpack.c.b16 %v234, %v233
    %v244 = vpack.c.b16 %v236, %v235
    %253 = vmatpush.bf16.msra.mxu0 %v244
    %254 = vmatpush.bf16.msra.mxu0 %v243
    %255 = vmatpush.bf16.msra.mxu0 %v242
    %256 = vmatpush.bf16.msra.mxu0 %v241
    %257 = vmatpush.bf16.msra.mxu0 %v240
    %258 = vmatpush.bf16.msra.mxu0 %v239
    %259 = vmatpush.bf16.msra.mxu0 %v238
    %260 = vmatpush.bf16.msra.mxu0 %v237
    %261 = vmatmul.bf16.gmra.mxu0 %v185
    %v262 = vpop.f32.mrf.mxu0
    %v263 = vadd.f32 0.0, %v262
    %v264 = vpop.f32.mrf.mxu0
    %v265 = vadd.f32 0.0, %v264
    %266 = vmatmul.bf16.gmra.mxu0 %v186
    %v267 = vpop.f32.mrf.mxu0
    %v268 = vadd.f32 0.0, %v267
    %v269 = vpop.f32.mrf.mxu0
    %v270 = vadd.f32 0.0, %v269
    %271 = vmatmul.bf16.gmra.mxu0 %v187
    %v272 = vpop.f32.mrf.mxu0
    %v273 = vadd.f32 0.0, %v272
    %v274 = vpop.f32.mrf.mxu0
    %v275 = vadd.f32 0.0, %v274
    %276 = vmatmul.bf16.gmra.mxu0 %v188
    %v277 = vpop.f32.mrf.mxu0
    %v278 = vadd.f32 0.0, %v277
    %v279 = vpop.f32.mrf.mxu0
    %v280 = vadd.f32 0.0, %v279
    %281 = vdwg.mxu0
    %v283 = vrot.slane %v182, 1
    %v284 = vrot.slane %v182, 2
    %v285 = vrot.slane %v182, 3
    %v286 = vrot.slane %v182, 4
    %v287 = vrot.slane %v182, 5
    %v288 = vrot.slane %v182, 6
    %v289 = vrot.slane %v182, 7
    %v290 = vperm.slane %v182, 0
    %v291 = vperm.slane %v283, 0
    %v292 = vperm.slane %v284, 0
    %v293 = vperm.slane %v285, 0
    %v294 = vperm.slane %v286, 0
    %v295 = vperm.slane %v287, 0
    %v296 = vperm.slane %v288, 0
    %v297 = vperm.slane %v289, 0
    %v306 = vadd.f32 %v263, %v290
    %v307 = vadd.f32 %v265, %v291
    %v308 = vadd.f32 %v268, %v292
    %v309 = vadd.f32 %v270, %v293
    %v310 = vadd.f32 %v273, %v294
    %v311 = vadd.f32 %v275, %v295
    %v312 = vadd.f32 %v278, %v296
    %v313 = vadd.f32 %v280, %v297
    %v314 = vld [vmem:[%s6] sm:$0x1]
    %v316 = vperm.slane %v314, 0
    %v318 = vadd.f32 %v306, %v316
    %v319 = vadd.f32 %v307, %v316
    %v320 = vadd.f32 %v308, %v316
    %v321 = vadd.f32 %v309, %v316
    %v322 = vadd.f32 %v310, %v316
    %v323 = vadd.f32 %v311, %v316
    %v324 = vadd.f32 %v312, %v316
    %v325 = vadd.f32 %v313, %v316
    %v326 = vtanh.pop %v318
    %v327 = vtanh.pop %v319
    %v328 = vtanh.pop %v320
    %v329 = vtanh.pop %v321
    %v330 = vtanh.pop %v322
    %v331 = vtanh.pop %v323
    %v332 = vtanh.pop %v324
    %v333 = vtanh.pop %v325
    %v334 = vld [vmem:[%s7] sm:$0x1]
    %v336 = vperm.slane %v334, 0
    %v338 = vmul.f32 %v326, %v336
    %v339 = vmul.f32 %v327, %v336
    %v340 = vmul.f32 %v328, %v336
    %v341 = vmul.f32 %v329, %v336
    %v342 = vmul.f32 %v330, %v336
    %v343 = vmul.f32 %v331, %v336
    %v344 = vmul.f32 %v332, %v336
    %v345 = vmul.f32 %v333, %v336
    %vm346 = vcmask 261120
    %v347 = vsel %vm346, %v338, 0.0
    %348 = vadd.xlane.f32.xlu0 %v347
    %v349 = vpop.xlane.xlu0 %348
    %v350 = vsel %vm346, %v339, 0.0
    %351 = vadd.xlane.f32.xlu0 %v350
    %v352 = vpop.xlane.xlu0 %351
    %v353 = vsel %vm346, %v340, 0.0
    %354 = vadd.xlane.f32.xlu0 %v353
    %v355 = vpop.xlane.xlu0 %354
    %v356 = vsel %vm346, %v341, 0.0
    %357 = vadd.xlane.f32.xlu0 %v356
    %v358 = vpop.xlane.xlu0 %357
    %v359 = vsel %vm346, %v342, 0.0
    %360 = vadd.xlane.f32.xlu0 %v359
    %v361 = vpop.xlane.xlu0 %360
    %v362 = vsel %vm346, %v343, 0.0
    %363 = vadd.xlane.f32.xlu0 %v362
    %v364 = vpop.xlane.xlu0 %363
    %v365 = vsel %vm346, %v344, 0.0
    %366 = vadd.xlane.f32.xlu0 %v365
    %v367 = vpop.xlane.xlu0 %366
    %v368 = vsel %vm346, %v345, 0.0
    %369 = vadd.xlane.f32.xlu0 %v368
    %v370 = vpop.xlane.xlu0 %369
    %v371 = vld [vmem:[%s0] sm:$0x1]
    %v372 = vld [vmem:[%s0 + $0x1] sm:$0x1]
    %v373 = vld [vmem:[%s0 + $0x2] sm:$0x1]
    %v374 = vld [vmem:[%s0 + $0x3] sm:$0x1]
    %v375 = vld [vmem:[%s0 + $0x4] sm:$0x1]
    %v376 = vld [vmem:[%s0 + $0x5] sm:$0x1]
    %v377 = vld [vmem:[%s0 + $0x6] sm:$0x1]
    %v378 = vld [vmem:[%s0 + $0x7] sm:$0x1]
    %vm379 = vcmp.gt.s32.totalorder %v371, 1
    %v380 = vsel %vm379, %v371, 1
    %vm381 = vcmp.gt.s32.totalorder %v372, 1
    %v382 = vsel %vm381, %v372, 1
    %vm383 = vcmp.gt.s32.totalorder %v373, 1
    %v384 = vsel %vm383, %v373, 1
    %vm385 = vcmp.gt.s32.totalorder %v374, 1
    %v386 = vsel %vm385, %v374, 1
    %vm387 = vcmp.gt.s32.totalorder %v375, 1
    %v388 = vsel %vm387, %v375, 1
    %vm389 = vcmp.gt.s32.totalorder %v376, 1
    %v390 = vsel %vm389, %v376, 1
    %vm391 = vcmp.gt.s32.totalorder %v377, 1
    %v392 = vsel %vm391, %v377, 1
    %vm393 = vcmp.gt.s32.totalorder %v378, 1
    %v394 = vsel %vm393, %v378, 1
    %v395 = vlaneseq
    %v396 = vshrl.u32 %v395, 7
    %v397 = vperm.slane %v380, 0
    %v398 = vperm.slane %v382, 0
    %v399 = vperm.slane %v384, 0
    %v400 = vperm.slane %v386, 0
    %v401 = vperm.slane %v388, 0
    %v402 = vperm.slane %v390, 0
    %v403 = vperm.slane %v392, 0
    %v404 = vperm.slane %v394, 0
    %vm405 = vcmp.lt.s32.totalorder %v396, %v397
    %vm406 = vcmp.lt.s32.totalorder %v396, %v398
    %vm407 = vcmp.lt.s32.totalorder %v396, %v399
    %vm408 = vcmp.lt.s32.totalorder %v396, %v400
    %vm409 = vcmp.lt.s32.totalorder %v396, %v401
    %vm410 = vcmp.lt.s32.totalorder %v396, %v402
    %vm411 = vcmp.lt.s32.totalorder %v396, %v403
    %vm412 = vcmp.lt.s32.totalorder %v396, %v404
    %v413 = vsel %vm405, %v349, -1e+30
    %v414 = vsel %vm406, %v352, -1e+30
    %v415 = vsel %vm407, %v355, -1e+30
    %v416 = vsel %vm408, %v358, -1e+30
    %v417 = vsel %vm409, %v361, -1e+30
    %v418 = vsel %vm410, %v364, -1e+30
    %v419 = vsel %vm411, %v367, -1e+30
    %v420 = vsel %vm412, %v370, -1e+30
    %vm421 = vcmask 7168
    %v422 = vsel %vm421, %v413, -inf
    %v423 = vrot.slane %v422, 4
    %v424 = vmax.f32 %v422, %v423
    %v425 = vrot.slane %v424, 2
    %v426 = vmax.f32 %v424, %v425
    %v427 = vrot.slane %v426, 1
    %v428 = vmax.f32 %v426, %v427
    %v429 = vsel %vm421, %v414, -inf
    %v430 = vrot.slane %v429, 4
    %v431 = vmax.f32 %v429, %v430
    %v432 = vrot.slane %v431, 2
    %v433 = vmax.f32 %v431, %v432
    %v434 = vrot.slane %v433, 1
    %v435 = vmax.f32 %v433, %v434
    %v436 = vsel %vm421, %v415, -inf
    %v437 = vrot.slane %v436, 4
    %v438 = vmax.f32 %v436, %v437
    %v439 = vrot.slane %v438, 2
    %v440 = vmax.f32 %v438, %v439
    %v441 = vrot.slane %v440, 1
    %v442 = vmax.f32 %v440, %v441
    %v443 = vsel %vm421, %v416, -inf
    %v444 = vrot.slane %v443, 4
    %v445 = vmax.f32 %v443, %v444
    %v446 = vrot.slane %v445, 2
    %v447 = vmax.f32 %v445, %v446
    %v448 = vrot.slane %v447, 1
    %v449 = vmax.f32 %v447, %v448
    %v450 = vsel %vm421, %v417, -inf
    %v451 = vrot.slane %v450, 4
    %v452 = vmax.f32 %v450, %v451
    %v453 = vrot.slane %v452, 2
    %v454 = vmax.f32 %v452, %v453
    %v455 = vrot.slane %v454, 1
    %v456 = vmax.f32 %v454, %v455
    %v457 = vsel %vm421, %v418, -inf
    %v458 = vrot.slane %v457, 4
    %v459 = vmax.f32 %v457, %v458
    %v460 = vrot.slane %v459, 2
    %v461 = vmax.f32 %v459, %v460
    %v462 = vrot.slane %v461, 1
    %v463 = vmax.f32 %v461, %v462
    %v464 = vsel %vm421, %v419, -inf
    %v465 = vrot.slane %v464, 4
    %v466 = vmax.f32 %v464, %v465
    %v467 = vrot.slane %v466, 2
    %v468 = vmax.f32 %v466, %v467
    %v469 = vrot.slane %v468, 1
    %v470 = vmax.f32 %v468, %v469
    %v471 = vsel %vm421, %v420, -inf
    %v472 = vrot.slane %v471, 4
    %v473 = vmax.f32 %v471, %v472
    %v474 = vrot.slane %v473, 2
    %v475 = vmax.f32 %v473, %v474
    %v476 = vrot.slane %v475, 1
    %v477 = vmax.f32 %v475, %v476
    %v478 = vsub.f32 %v413, %v428
    %v479 = vsub.f32 %v414, %v435
    %v480 = vsub.f32 %v415, %v442
    %v481 = vsub.f32 %v416, %v449
    %v482 = vsub.f32 %v417, %v456
    %v483 = vsub.f32 %v418, %v463
    %v484 = vsub.f32 %v419, %v470
    %v485 = vsub.f32 %v420, %v477
    %v486 = vmul.f32 %v478, 1.442695
    %v487 = vpow.pop %v486
    %v488 = vmul.f32 %v479, 1.442695
    %v489 = vpow.pop %v488
    %v490 = vmul.f32 %v480, 1.442695
    %v491 = vpow.pop %v490
    %v492 = vmul.f32 %v481, 1.442695
    %v493 = vpow.pop %v492
    %v494 = vmul.f32 %v482, 1.442695
    %v495 = vpow.pop %v494
    %v496 = vmul.f32 %v483, 1.442695
    %v497 = vpow.pop %v496
    %v498 = vmul.f32 %v484, 1.442695
    %v499 = vpow.pop %v498
    %v500 = vmul.f32 %v485, 1.442695
    %v501 = vpow.pop %v500
    %v502 = vsel %vm421, %v487, 0.0
    %v503 = vrot.slane %v502, 4
    %v504 = vadd.f32 %v502, %v503
    %v505 = vrot.slane %v504, 2
    %v506 = vadd.f32 %v504, %v505
    %v507 = vrot.slane %v506, 1
    %v508 = vadd.f32 %v506, %v507
    %v509 = vsel %vm421, %v489, 0.0
    %v510 = vrot.slane %v509, 4
    %v511 = vadd.f32 %v509, %v510
    %v512 = vrot.slane %v511, 2
    %v513 = vadd.f32 %v511, %v512
    %v514 = vrot.slane %v513, 1
    %v515 = vadd.f32 %v513, %v514
    %v516 = vsel %vm421, %v491, 0.0
    %v517 = vrot.slane %v516, 4
    %v518 = vadd.f32 %v516, %v517
    %v519 = vrot.slane %v518, 2
    %v520 = vadd.f32 %v518, %v519
    %v521 = vrot.slane %v520, 1
    %v522 = vadd.f32 %v520, %v521
    %v523 = vsel %vm421, %v493, 0.0
    %v524 = vrot.slane %v523, 4
    %v525 = vadd.f32 %v523, %v524
    %v526 = vrot.slane %v525, 2
    %v527 = vadd.f32 %v525, %v526
    %v528 = vrot.slane %v527, 1
    %v529 = vadd.f32 %v527, %v528
    %v530 = vsel %vm421, %v495, 0.0
    %v531 = vrot.slane %v530, 4
    %v532 = vadd.f32 %v530, %v531
    %v533 = vrot.slane %v532, 2
    %v534 = vadd.f32 %v532, %v533
    %v535 = vrot.slane %v534, 1
    %v536 = vadd.f32 %v534, %v535
    %v537 = vsel %vm421, %v497, 0.0
    %v538 = vrot.slane %v537, 4
    %v539 = vadd.f32 %v537, %v538
    %v540 = vrot.slane %v539, 2
    %v541 = vadd.f32 %v539, %v540
    %v542 = vrot.slane %v541, 1
    %v543 = vadd.f32 %v541, %v542
    %v544 = vsel %vm421, %v499, 0.0
    %v545 = vrot.slane %v544, 4
    %v546 = vadd.f32 %v544, %v545
    %v547 = vrot.slane %v546, 2
    %v548 = vadd.f32 %v546, %v547
    %v549 = vrot.slane %v548, 1
    %v550 = vadd.f32 %v548, %v549
    %v551 = vsel %vm421, %v501, 0.0
    %v552 = vrot.slane %v551, 4
    %v553 = vadd.f32 %v551, %v552
    %v554 = vrot.slane %v553, 2
    %v555 = vadd.f32 %v553, %v554
    %v556 = vrot.slane %v555, 1
    %v557 = vadd.f32 %v555, %v556
    %v558 = vrcp.pop %v508
    %v559 = vrcp.pop %v515
    %v560 = vrcp.pop %v522
    %v561 = vrcp.pop %v529
    %v562 = vrcp.pop %v536
    %v563 = vrcp.pop %v543
    %v564 = vrcp.pop %v550
    %v565 = vrcp.pop %v557
    %v566 = vmul.f32 %v487, %v558
    %v567 = vmul.f32 %v489, %v559
    %v568 = vmul.f32 %v491, %v560
    %v569 = vmul.f32 %v493, %v561
    %v570 = vmul.f32 %v495, %v562
    %v571 = vmul.f32 %v497, %v563
    %v572 = vmul.f32 %v499, %v564
    %v573 = vmul.f32 %v501, %v565
    %575 = vset.pattern.permute.xlu0 0
    %576 = vperm.xlu0 %575, %v566
    %v577 = vpop.permute.xlu0 %576
    %580 = vset.pattern.permute.xlu0 0
    %581 = vperm.xlu0 %580, %v567
    %v582 = vpop.permute.xlu0 %581
    %585 = vset.pattern.permute.xlu0 0
    %586 = vperm.xlu0 %585, %v568
    %v587 = vpop.permute.xlu0 %586
    %590 = vset.pattern.permute.xlu0 0
    %591 = vperm.xlu0 %590, %v569
    %v592 = vpop.permute.xlu0 %591
    %595 = vset.pattern.permute.xlu0 0
    %596 = vperm.xlu0 %595, %v570
    %v597 = vpop.permute.xlu0 %596
    %600 = vset.pattern.permute.xlu0 0
    %601 = vperm.xlu0 %600, %v571
    %v602 = vpop.permute.xlu0 %601
    %605 = vset.pattern.permute.xlu0 0
    %606 = vperm.xlu0 %605, %v572
    %v607 = vpop.permute.xlu0 %606
    %610 = vset.pattern.permute.xlu0 0
    %611 = vperm.xlu0 %610, %v573
    %v612 = vpop.permute.xlu0 %611
    %v614 = vmul.f32 %v577, %v97
    %v615 = vmul.f32 %v582, %v98
    %v616 = vmul.f32 %v587, %v99
    %v617 = vmul.f32 %v592, %v100
    %v618 = vmul.f32 %v597, %v101
    %v619 = vmul.f32 %v602, %v102
    %v620 = vmul.f32 %v607, %v103
    %v621 = vmul.f32 %v612, %v104
    %v622 = vrot.slane %v614, 4
    %v623 = vadd.f32 %v614, %v622
    %v624 = vrot.slane %v623, 2
    %v625 = vadd.f32 %v623, %v624
    %v626 = vrot.slane %v625, 1
    %v627 = vadd.f32 %v625, %v626
    %v628 = vrot.slane %v615, 4
    %v629 = vadd.f32 %v615, %v628
    %v630 = vrot.slane %v629, 2
    %v631 = vadd.f32 %v629, %v630
    %v632 = vrot.slane %v631, 1
    %v633 = vadd.f32 %v631, %v632
    %v634 = vrot.slane %v616, 4
    %v635 = vadd.f32 %v616, %v634
    %v636 = vrot.slane %v635, 2
    %v637 = vadd.f32 %v635, %v636
    %v638 = vrot.slane %v637, 1
    %v639 = vadd.f32 %v637, %v638
    %v640 = vrot.slane %v617, 4
    %v641 = vadd.f32 %v617, %v640
    %v642 = vrot.slane %v641, 2
    %v643 = vadd.f32 %v641, %v642
    %v644 = vrot.slane %v643, 1
    %v645 = vadd.f32 %v643, %v644
    %v646 = vrot.slane %v618, 4
    %v647 = vadd.f32 %v618, %v646
    %v648 = vrot.slane %v647, 2
    %v649 = vadd.f32 %v647, %v648
    %v650 = vrot.slane %v649, 1
    %v651 = vadd.f32 %v649, %v650
    %v652 = vrot.slane %v619, 4
    %v653 = vadd.f32 %v619, %v652
    %v654 = vrot.slane %v653, 2
    %v655 = vadd.f32 %v653, %v654
    %v656 = vrot.slane %v655, 1
    %v657 = vadd.f32 %v655, %v656
    %v658 = vrot.slane %v620, 4
    %v659 = vadd.f32 %v620, %v658
    %v660 = vrot.slane %v659, 2
    %v661 = vadd.f32 %v659, %v660
    %v662 = vrot.slane %v661, 1
    %v663 = vadd.f32 %v661, %v662
    %v664 = vrot.slane %v621, 4
    %v665 = vadd.f32 %v621, %v664
    %v666 = vrot.slane %v665, 2
    %v667 = vadd.f32 %v665, %v666
    %v668 = vrot.slane %v667, 1
    %v669 = vadd.f32 %v667, %v668
    %v670 = vpack.c.bf16 %v627, %v627
    %v671 = vpack.c.bf16 %v633, %v633
    %v672 = vpack.c.bf16 %v639, %v639
    %v673 = vpack.c.bf16 %v645, %v645
    %v674 = vpack.c.bf16 %v651, %v651
    %v675 = vpack.c.bf16 %v657, %v657
    %v676 = vpack.c.bf16 %v663, %v663
    %v677 = vpack.c.bf16 %v669, %v669
    %v686 = vperm.slane %v670, 0
    %v687 = vperm.slane %v671, 0
    %v688 = vperm.slane %v672, 0
    %v689 = vperm.slane %v673, 0
    %v690 = vperm.slane %v674, 0
    %v691 = vperm.slane %v675, 0
    %v692 = vperm.slane %v676, 0
    %v693 = vperm.slane %v677, 0
    %v694 = vunpack.c.l.b16 %v686
    %v695 = vunpack.c.l.b16 %v687
    %v696 = vunpack.c.l.b16 %v688
    %v697 = vunpack.c.l.b16 %v689
    %v698 = vunpack.c.l.b16 %v690
    %v699 = vunpack.c.l.b16 %v691
    %v700 = vunpack.c.l.b16 %v692
    %v701 = vunpack.c.l.b16 %v693
    %vm702 = vcmask 1041409
    %v703 = vsel %vm702, %v695, %v694
    %vm704 = vcmask 1042434
    %v705 = vsel %vm704, %v696, %v703
    %vm706 = vcmask 1043459
    %v707 = vsel %vm706, %v697, %v705
    %vm708 = vcmask 1044484
    %v709 = vsel %vm708, %v698, %v707
    %vm710 = vcmask 1045509
    %v711 = vsel %vm710, %v699, %v709
    %vm712 = vcmask 1046534
    %v713 = vsel %vm712, %v700, %v711
    %vm714 = vcmask 1047559
    %v715 = vsel %vm714, %v701, %v713
    %v716 = vpack.c.b16 %v715, %v715
    %v718 = vld [vmem:[#allocation2] sm:$0xff]
    %v719 = vld [vmem:[#allocation2 + $0x8] sm:$0xf]
    %v720 = vld [vmem:[#allocation2 + $0xc] sm:$0xff]
    %v721 = vld [vmem:[#allocation2 + $0x14] sm:$0xf]
    %v722 = vld [vmem:[#allocation2 + $0x18] sm:$0xff]
    %v723 = vld [vmem:[#allocation2 + $0x20] sm:$0xf]
    %v724 = vld [vmem:[#allocation2 + $0x24] sm:$0xff]
    %v725 = vld [vmem:[#allocation2 + $0x2c] sm:$0xf]
    %v726 = vld [vmem:[#allocation2 + $0x30] sm:$0xff]
    %v727 = vld [vmem:[#allocation2 + $0x38] sm:$0xf]
    %v728 = vld [vmem:[#allocation2 + $0x3c] sm:$0xff]
    %v729 = vld [vmem:[#allocation2 + $0x44] sm:$0xf]
    %v730 = vld [vmem:[#allocation2 + $0x48] sm:$0xff]
    %v731 = vld [vmem:[#allocation2 + $0x50] sm:$0xf]
    %v732 = vld [vmem:[#allocation2 + $0x54] sm:$0xff]
    %v733 = vld [vmem:[#allocation2 + $0x5c] sm:$0xf]
    %v734 = vld [vmem:[#allocation2 + $0x60] sm:$0xff]
    %v735 = vld [vmem:[#allocation2 + $0x68] sm:$0xf]
    %v736 = vld [vmem:[#allocation2 + $0x6c] sm:$0xff]
    %v737 = vld [vmem:[#allocation2 + $0x74] sm:$0xf]
    %v738 = vld [vmem:[#allocation2 + $0x78] sm:$0xff]
    %v739 = vld [vmem:[#allocation2 + $0x80] sm:$0xf]
    %v740 = vld [vmem:[#allocation2 + $0x84] sm:$0xff]
    %v741 = vld [vmem:[#allocation2 + $0x8c] sm:$0xf]
    %v742 = vld [vmem:[#allocation2 + $0x90] sm:$0xff]
    %v743 = vld [vmem:[#allocation2 + $0x98] sm:$0xf]
    %v744 = vld [vmem:[#allocation2 + $0x9c] sm:$0xff]
    %v745 = vld [vmem:[#allocation2 + $0xa4] sm:$0xf]
    %v746 = vld [vmem:[#allocation2 + $0xa8] sm:$0xff]
    %v747 = vld [vmem:[#allocation2 + $0xb0] sm:$0xf]
    %v748 = vld [vmem:[#allocation2 + $0xb4] sm:$0xff]
    %v749 = vld [vmem:[#allocation2 + $0xbc] sm:$0xf]
    %v750 = vld [vmem:[#allocation2 + $0xc0] sm:$0xff]
    %v751 = vld [vmem:[#allocation2 + $0xc8] sm:$0xf]
    %v752 = vld [vmem:[#allocation2 + $0xcc] sm:$0xff]
    %v753 = vld [vmem:[#allocation2 + $0xd4] sm:$0xf]
    %v754 = vld [vmem:[#allocation2 + $0xd8] sm:$0xff]
    %v755 = vld [vmem:[#allocation2 + $0xe0] sm:$0xf]
    %v756 = vld [vmem:[#allocation2 + $0xe4] sm:$0xff]
    %v757 = vld [vmem:[#allocation2 + $0xec] sm:$0xf]
    %v758 = vld [vmem:[#allocation2 + $0xf0] sm:$0xff]
    %v759 = vld [vmem:[#allocation2 + $0xf8] sm:$0xf]
    %v760 = vld [vmem:[#allocation2 + $0xfc] sm:$0xff]
    %v761 = vld [vmem:[#allocation2 + $0x104] sm:$0xf]
    %v762 = vld [vmem:[#allocation2 + $0x108] sm:$0xff]
    %v763 = vld [vmem:[#allocation2 + $0x110] sm:$0xf]
    %v764 = vld [vmem:[#allocation2 + $0x114] sm:$0xff]
    %v765 = vld [vmem:[#allocation2 + $0x11c] sm:$0xf]
    %v766 = vld [vmem:[#allocation2 + $0x120] sm:$0xff]
    %v767 = vld [vmem:[#allocation2 + $0x128] sm:$0xf]
    %v768 = vld [vmem:[#allocation2 + $0x12c] sm:$0xff]
    %v769 = vld [vmem:[#allocation2 + $0x134] sm:$0xf]
    %v770 = vld [vmem:[#allocation2 + $0x138] sm:$0xff]
    %v771 = vld [vmem:[#allocation2 + $0x140] sm:$0xf]
    %v772 = vld [vmem:[#allocation2 + $0x144] sm:$0xff]
    %v773 = vld [vmem:[#allocation2 + $0x14c] sm:$0xf]
    %v774 = vld [vmem:[#allocation2 + $0x150] sm:$0xff]
    %v775 = vld [vmem:[#allocation2 + $0x158] sm:$0xf]
    %v776 = vld [vmem:[#allocation2 + $0x15c] sm:$0xff]
    %v777 = vld [vmem:[#allocation2 + $0x164] sm:$0xf]
    %v778 = vld [vmem:[#allocation2 + $0x168] sm:$0xff]
    %v779 = vld [vmem:[#allocation2 + $0x170] sm:$0xf]
    %v780 = vld [vmem:[#allocation2 + $0x174] sm:$0xff]
    %v781 = vld [vmem:[#allocation2 + $0x17c] sm:$0xf]
    %v782 = vld [vmem:[%s10] sm:$0x7]
    %v784 = vperm.slane %v782, 0
    %v785 = vperm.slane %v782, 1
    %v786 = vperm.slane %v782, 2
    %v854 = vunpack.c.l.b16 %v718
    %v855 = vunpack.c.h.b16 %v718
    %v856 = vunpack.c.l.b16 %v719
    %v857 = vunpack.c.l.b16 %v720
    %v858 = vunpack.c.h.b16 %v720
    %v859 = vunpack.c.l.b16 %v721
    %v860 = vunpack.c.l.b16 %v722
    %v861 = vunpack.c.h.b16 %v722
    %v862 = vunpack.c.l.b16 %v723
    %v863 = vunpack.c.l.b16 %v724
    %v864 = vunpack.c.h.b16 %v724
    %v865 = vunpack.c.l.b16 %v725
    %v866 = vunpack.c.l.b16 %v726
    %v867 = vunpack.c.h.b16 %v726
    %v868 = vunpack.c.l.b16 %v727
    %v869 = vunpack.c.l.b16 %v728
    %v870 = vunpack.c.h.b16 %v728
    %v871 = vunpack.c.l.b16 %v729
    %v872 = vunpack.c.l.b16 %v730
    %v873 = vunpack.c.h.b16 %v730
    %v874 = vunpack.c.l.b16 %v731
    %v875 = vunpack.c.l.b16 %v732
    %v876 = vunpack.c.h.b16 %v732
    %v877 = vunpack.c.l.b16 %v733
    %v878 = vunpack.c.l.b16 %v734
    %v879 = vunpack.c.h.b16 %v734
    %v880 = vunpack.c.l.b16 %v735
    %v881 = vunpack.c.l.b16 %v736
    %v882 = vunpack.c.h.b16 %v736
    %v883 = vunpack.c.l.b16 %v737
    %v884 = vunpack.c.l.b16 %v738
    %v885 = vunpack.c.h.b16 %v738
    %v886 = vunpack.c.l.b16 %v739
    %v887 = vunpack.c.l.b16 %v740
    %v888 = vunpack.c.h.b16 %v740
    %v889 = vunpack.c.l.b16 %v741
    %v890 = vunpack.c.l.b16 %v742
    %v891 = vunpack.c.h.b16 %v742
    %v892 = vunpack.c.l.b16 %v743
    %v893 = vunpack.c.l.b16 %v744
    %v894 = vunpack.c.h.b16 %v744
    %v895 = vunpack.c.l.b16 %v745
    %v896 = vunpack.c.l.b16 %v746
    %v897 = vunpack.c.h.b16 %v746
    %v898 = vunpack.c.l.b16 %v747
    %v899 = vunpack.c.l.b16 %v748
    %v900 = vunpack.c.h.b16 %v748
    %v901 = vunpack.c.l.b16 %v749
    %v902 = vunpack.c.l.b16 %v750
    %v903 = vunpack.c.h.b16 %v750
    %v904 = vunpack.c.l.b16 %v751
    %v905 = vunpack.c.l.b16 %v752
    %v906 = vunpack.c.h.b16 %v752
    %v907 = vunpack.c.l.b16 %v753
    %v908 = vunpack.c.l.b16 %v754
    %v909 = vunpack.c.h.b16 %v754
    %v910 = vunpack.c.l.b16 %v755
    %v911 = vunpack.c.l.b16 %v756
    %v912 = vunpack.c.h.b16 %v756
    %v913 = vunpack.c.l.b16 %v757
    %v914 = vunpack.c.l.b16 %v758
    %v915 = vunpack.c.h.b16 %v758
    %v916 = vunpack.c.l.b16 %v759
    %v917 = vunpack.c.l.b16 %v760
    %v918 = vunpack.c.h.b16 %v760
    %v919 = vunpack.c.l.b16 %v761
    %v920 = vunpack.c.l.b16 %v762
    %v921 = vunpack.c.h.b16 %v762
    %v922 = vunpack.c.l.b16 %v763
    %v923 = vunpack.c.l.b16 %v764
    %v924 = vunpack.c.h.b16 %v764
    %v925 = vunpack.c.l.b16 %v765
    %v926 = vunpack.c.l.b16 %v766
    %v927 = vunpack.c.h.b16 %v766
    %v928 = vunpack.c.l.b16 %v767
    %v929 = vunpack.c.l.b16 %v768
    %v930 = vunpack.c.h.b16 %v768
    %v931 = vunpack.c.l.b16 %v769
    %v932 = vunpack.c.l.b16 %v770
    %v933 = vunpack.c.h.b16 %v770
    %v934 = vunpack.c.l.b16 %v771
    %v935 = vunpack.c.l.b16 %v772
    %v936 = vunpack.c.h.b16 %v772
    %v937 = vunpack.c.l.b16 %v773
    %v938 = vunpack.c.l.b16 %v774
    %v939 = vunpack.c.h.b16 %v774
    %v940 = vunpack.c.l.b16 %v775
    %v941 = vunpack.c.l.b16 %v776
    %v942 = vunpack.c.h.b16 %v776
    %v943 = vunpack.c.l.b16 %v777
    %v944 = vunpack.c.l.b16 %v778
    %v945 = vunpack.c.h.b16 %v778
    %v946 = vunpack.c.l.b16 %v779
    %v947 = vunpack.c.l.b16 %v780
    %v948 = vunpack.c.h.b16 %v780
    %v949 = vunpack.c.l.b16 %v781
    %v950 = vpack.c.b16 %v857, %v854
    %v951 = vpack.c.b16 %v858, %v855
    %v952 = vpack.c.b16 %v859, %v856
    %v953 = vpack.c.b16 %v863, %v860
    %v954 = vpack.c.b16 %v864, %v861
    %v955 = vpack.c.b16 %v865, %v862
    %v956 = vpack.c.b16 %v869, %v866
    %v957 = vpack.c.b16 %v870, %v867
    %v958 = vpack.c.b16 %v871, %v868
    %v959 = vpack.c.b16 %v875, %v872
    %v960 = vpack.c.b16 %v876, %v873
    %v961 = vpack.c.b16 %v877, %v874
    %v962 = vpack.c.b16 %v881, %v878
    %v963 = vpack.c.b16 %v882, %v879
    %v964 = vpack.c.b16 %v883, %v880
    %v965 = vpack.c.b16 %v887, %v884
    %v966 = vpack.c.b16 %v888, %v885
    %v967 = vpack.c.b16 %v889, %v886
    %v968 = vpack.c.b16 %v893, %v890
    %v969 = vpack.c.b16 %v894, %v891
    %v970 = vpack.c.b16 %v895, %v892
    %v971 = vpack.c.b16 %v899, %v896
    %v972 = vpack.c.b16 %v900, %v897
    %v973 = vpack.c.b16 %v901, %v898
    %v974 = vpack.c.b16 %v905, %v902
    %v975 = vpack.c.b16 %v906, %v903
    %v976 = vpack.c.b16 %v907, %v904
    %v977 = vpack.c.b16 %v911, %v908
    %v978 = vpack.c.b16 %v912, %v909
    %v979 = vpack.c.b16 %v913, %v910
    %v980 = vpack.c.b16 %v917, %v914
    %v981 = vpack.c.b16 %v918, %v915
    %v982 = vpack.c.b16 %v919, %v916
    %v983 = vpack.c.b16 %v923, %v920
    %v984 = vpack.c.b16 %v924, %v921
    %v985 = vpack.c.b16 %v925, %v922
    %v986 = vpack.c.b16 %v929, %v926
    %v987 = vpack.c.b16 %v930, %v927
    %v988 = vpack.c.b16 %v931, %v928
    %v989 = vpack.c.b16 %v935, %v932
    %v990 = vpack.c.b16 %v936, %v933
    %v991 = vpack.c.b16 %v937, %v934
    %v992 = vpack.c.b16 %v941, %v938
    %v993 = vpack.c.b16 %v942, %v939
    %v994 = vpack.c.b16 %v943, %v940
    %v995 = vpack.c.b16 %v947, %v944
    %v996 = vpack.c.b16 %v948, %v945
    %v997 = vpack.c.b16 %v949, %v946
    %1046 = vmatpush.bf16.msra.mxu0 %v971
    %1047 = vmatpush.bf16.msra.mxu0 %v968
    %1048 = vmatpush.bf16.msra.mxu0 %v965
    %1049 = vmatpush.bf16.msra.mxu0 %v962
    %1050 = vmatpush.bf16.msra.mxu0 %v959
    %1051 = vmatpush.bf16.msra.mxu0 %v956
    %1052 = vmatpush.bf16.msra.mxu0 %v953
    %1053 = vmatpush.bf16.msra.mxu0 %v950
    %1054 = vmatmul.bf16.gmra.mxu0 %v106
    %v1055 = vpop.f32.mrf.mxu0
    %v1056 = vadd.f32 %v784, %v1055
    %v1057 = vpop.f32.mrf.mxu0
    %1058 = vdwg.mxu0
    %1059 = vmatpush.bf16.msra.mxu0 %v995
    %1060 = vmatpush.bf16.msra.mxu0 %v992
    %1061 = vmatpush.bf16.msra.mxu0 %v989
    %1062 = vmatpush.bf16.msra.mxu0 %v986
    %1063 = vmatpush.bf16.msra.mxu0 %v983
    %1064 = vmatpush.bf16.msra.mxu0 %v980
    %1065 = vmatpush.bf16.msra.mxu0 %v977
    %1066 = vmatpush.bf16.msra.mxu0 %v974
    %1067 = vmatmul.bf16.gmra.mxu0 %v716
    %v1068 = vpop.f32.mrf.mxu0
    %v1069 = vadd.f32 %v1056, %v1068
    %v1070 = vpop.f32.mrf.mxu0
    %1071 = vdwg.mxu0
    %1072 = vmatpush.bf16.msra.mxu0 %v972
    %1073 = vmatpush.bf16.msra.mxu0 %v969
    %1074 = vmatpush.bf16.msra.mxu0 %v966
    %1075 = vmatpush.bf16.msra.mxu0 %v963
    %1076 = vmatpush.bf16.msra.mxu0 %v960
    %1077 = vmatpush.bf16.msra.mxu0 %v957
    %1078 = vmatpush.bf16.msra.mxu0 %v954
    %1079 = vmatpush.bf16.msra.mxu0 %v951
    %1080 = vmatmul.bf16.gmra.mxu0 %v106
    %v1081 = vpop.f32.mrf.mxu0
    %v1082 = vadd.f32 %v785, %v1081
    %v1083 = vpop.f32.mrf.mxu0
    %1084 = vdwg.mxu0
    %1085 = vmatpush.bf16.msra.mxu0 %v996
    %1086 = vmatpush.bf16.msra.mxu0 %v993
    %1087 = vmatpush.bf16.msra.mxu0 %v990
    %1088 = vmatpush.bf16.msra.mxu0 %v987
    %1089 = vmatpush.bf16.msra.mxu0 %v984
    %1090 = vmatpush.bf16.msra.mxu0 %v981
    %1091 = vmatpush.bf16.msra.mxu0 %v978
    %1092 = vmatpush.bf16.msra.mxu0 %v975
    %1093 = vmatmul.bf16.gmra.mxu0 %v716
    %v1094 = vpop.f32.mrf.mxu0
    %v1095 = vadd.f32 %v1082, %v1094
    %v1096 = vpop.f32.mrf.mxu0
    %1097 = vdwg.mxu0
    %1098 = vmatpush.bf16.msra.mxu0 %v973
    %1099 = vmatpush.bf16.msra.mxu0 %v970
    %1100 = vmatpush.bf16.msra.mxu0 %v967
    %1101 = vmatpush.bf16.msra.mxu0 %v964
    %1102 = vmatpush.bf16.msra.mxu0 %v961
    %1103 = vmatpush.bf16.msra.mxu0 %v958
    %1104 = vmatpush.bf16.msra.mxu0 %v955
    %1105 = vmatpush.bf16.msra.mxu0 %v952
    %1106 = vmatmul.bf16.gmra.mxu0 %v106
    %v1107 = vpop.f32.mrf.mxu0
    %v1108 = vadd.f32 %v786, %v1107
    %v1109 = vpop.f32.mrf.mxu0
    %1110 = vdwg.mxu0
    %1111 = vmatpush.bf16.msra.mxu0 %v997
    %1112 = vmatpush.bf16.msra.mxu0 %v994
    %1113 = vmatpush.bf16.msra.mxu0 %v991
    %1114 = vmatpush.bf16.msra.mxu0 %v988
    %1115 = vmatpush.bf16.msra.mxu0 %v985
    %1116 = vmatpush.bf16.msra.mxu0 %v982
    %1117 = vmatpush.bf16.msra.mxu0 %v979
    %1118 = vmatpush.bf16.msra.mxu0 %v976
    %1119 = vmatmul.bf16.gmra.mxu0 %v716
    %v1120 = vpop.f32.mrf.mxu0
    %v1121 = vadd.f32 %v1108, %v1120
    %v1122 = vpop.f32.mrf.mxu0
    %1123 = vdwg.mxu0
    %v1124 = vld [vmem:[#allocation4] sm:$0xff]
    %v1125 = vld [vmem:[#allocation4 + $0x8] sm:$0xf]
    %v1126 = vld [vmem:[#allocation4 + $0xc] sm:$0xff]
    %v1127 = vld [vmem:[#allocation4 + $0x14] sm:$0xf]
    %v1128 = vld [vmem:[#allocation4 + $0x18] sm:$0xff]
    %v1129 = vld [vmem:[#allocation4 + $0x20] sm:$0xf]
    %v1130 = vld [vmem:[#allocation4 + $0x24] sm:$0xff]
    %v1131 = vld [vmem:[#allocation4 + $0x2c] sm:$0xf]
    %v1132 = vld [vmem:[#allocation4 + $0x30] sm:$0xff]
    %v1133 = vld [vmem:[#allocation4 + $0x38] sm:$0xf]
    %v1134 = vld [vmem:[#allocation4 + $0x3c] sm:$0xff]
    %v1135 = vld [vmem:[#allocation4 + $0x44] sm:$0xf]
    %v1136 = vld [vmem:[#allocation4 + $0x48] sm:$0xff]
    %v1137 = vld [vmem:[#allocation4 + $0x50] sm:$0xf]
    %v1138 = vld [vmem:[#allocation4 + $0x54] sm:$0xff]
    %v1139 = vld [vmem:[#allocation4 + $0x5c] sm:$0xf]
    %v1140 = vld [vmem:[#allocation4 + $0x60] sm:$0xff]
    %v1141 = vld [vmem:[#allocation4 + $0x68] sm:$0xf]
    %v1142 = vld [vmem:[#allocation4 + $0x6c] sm:$0xff]
    %v1143 = vld [vmem:[#allocation4 + $0x74] sm:$0xf]
    %v1144 = vld [vmem:[#allocation4 + $0x78] sm:$0xff]
    %v1145 = vld [vmem:[#allocation4 + $0x80] sm:$0xf]
    %v1146 = vld [vmem:[#allocation4 + $0x84] sm:$0xff]
    %v1147 = vld [vmem:[#allocation4 + $0x8c] sm:$0xf]
    %v1148 = vld [vmem:[#allocation4 + $0x90] sm:$0xff]
    %v1149 = vld [vmem:[#allocation4 + $0x98] sm:$0xf]
    %v1150 = vld [vmem:[#allocation4 + $0x9c] sm:$0xff]
    %v1151 = vld [vmem:[#allocation4 + $0xa4] sm:$0xf]
    %v1152 = vld [vmem:[#allocation4 + $0xa8] sm:$0xff]
    %v1153 = vld [vmem:[#allocation4 + $0xb0] sm:$0xf]
    %v1154 = vld [vmem:[#allocation4 + $0xb4] sm:$0xff]
    %v1155 = vld [vmem:[#allocation4 + $0xbc] sm:$0xf]
    %v1156 = vld [vmem:[%s11] sm:$0x7]
    %v1158 = vperm.slane %v1156, 0
    %v1159 = vperm.slane %v1156, 1
    %v1160 = vperm.slane %v1156, 2
    %v1196 = vunpack.c.l.b16 %v1124
    %v1197 = vunpack.c.h.b16 %v1124
    %v1198 = vunpack.c.l.b16 %v1125
    %v1199 = vunpack.c.l.b16 %v1126
    %v1200 = vunpack.c.h.b16 %v1126
    %v1201 = vunpack.c.l.b16 %v1127
    %v1202 = vunpack.c.l.b16 %v1128
    %v1203 = vunpack.c.h.b16 %v1128
    %v1204 = vunpack.c.l.b16 %v1129
    %v1205 = vunpack.c.l.b16 %v1130
    %v1206 = vunpack.c.h.b16 %v1130
    %v1207 = vunpack.c.l.b16 %v1131
    %v1208 = vunpack.c.l.b16 %v1132
    %v1209 = vunpack.c.h.b16 %v1132
    %v1210 = vunpack.c.l.b16 %v1133
    %v1211 = vunpack.c.l.b16 %v1134
    %v1212 = vunpack.c.h.b16 %v1134
    %v1213 = vunpack.c.l.b16 %v1135
    %v1214 = vunpack.c.l.b16 %v1136
    %v1215 = vunpack.c.h.b16 %v1136
    %v1216 = vunpack.c.l.b16 %v1137
    %v1217 = vunpack.c.l.b16 %v1138
    %v1218 = vunpack.c.h.b16 %v1138
    %v1219 = vunpack.c.l.b16 %v1139
    %v1220 = vunpack.c.l.b16 %v1140
    %v1221 = vunpack.c.h.b16 %v1140
    %v1222 = vunpack.c.l.b16 %v1141
    %v1223 = vunpack.c.l.b16 %v1142
    %v1224 = vunpack.c.h.b16 %v1142
    %v1225 = vunpack.c.l.b16 %v1143
    %v1226 = vunpack.c.l.b16 %v1144
    %v1227 = vunpack.c.h.b16 %v1144
    %v1228 = vunpack.c.l.b16 %v1145
    %v1229 = vunpack.c.l.b16 %v1146
    %v1230 = vunpack.c.h.b16 %v1146
    %v1231 = vunpack.c.l.b16 %v1147
    %v1232 = vunpack.c.l.b16 %v1148
    %v1233 = vunpack.c.h.b16 %v1148
    %v1234 = vunpack.c.l.b16 %v1149
    %v1235 = vunpack.c.l.b16 %v1150
    %v1236 = vunpack.c.h.b16 %v1150
    %v1237 = vunpack.c.l.b16 %v1151
    %v1238 = vunpack.c.l.b16 %v1152
    %v1239 = vunpack.c.h.b16 %v1152
    %v1240 = vunpack.c.l.b16 %v1153
    %v1241 = vunpack.c.l.b16 %v1154
    %v1242 = vunpack.c.h.b16 %v1154
    %v1243 = vunpack.c.l.b16 %v1155
    %v1244 = vpack.c.b16 %v1199, %v1196
    %v1245 = vpack.c.b16 %v1200, %v1197
    %v1246 = vpack.c.b16 %v1201, %v1198
    %v1247 = vpack.c.b16 %v1205, %v1202
    %v1248 = vpack.c.b16 %v1206, %v1203
    %v1249 = vpack.c.b16 %v1207, %v1204
    %v1250 = vpack.c.b16 %v1211, %v1208
    %v1251 = vpack.c.b16 %v1212, %v1209
    %v1252 = vpack.c.b16 %v1213, %v1210
    %v1253 = vpack.c.b16 %v1217, %v1214
    %v1254 = vpack.c.b16 %v1218, %v1215
    %v1255 = vpack.c.b16 %v1219, %v1216
    %v1256 = vpack.c.b16 %v1223, %v1220
    %v1257 = vpack.c.b16 %v1224, %v1221
    %v1258 = vpack.c.b16 %v1225, %v1222
    %v1259 = vpack.c.b16 %v1229, %v1226
    %v1260 = vpack.c.b16 %v1230, %v1227
    %v1261 = vpack.c.b16 %v1231, %v1228
    %v1262 = vpack.c.b16 %v1235, %v1232
    %v1263 = vpack.c.b16 %v1236, %v1233
    %v1264 = vpack.c.b16 %v1237, %v1234
    %v1265 = vpack.c.b16 %v1241, %v1238
    %v1266 = vpack.c.b16 %v1242, %v1239
    %v1267 = vpack.c.b16 %v1243, %v1240
    %1292 = vmatpush.bf16.msra.mxu0 %v1265
    %1293 = vmatpush.bf16.msra.mxu0 %v1262
    %1294 = vmatpush.bf16.msra.mxu0 %v1259
    %1295 = vmatpush.bf16.msra.mxu0 %v1256
    %1296 = vmatpush.bf16.msra.mxu0 %v1253
    %1297 = vmatpush.bf16.msra.mxu0 %v1250
    %1298 = vmatpush.bf16.msra.mxu0 %v1247
    %1299 = vmatpush.bf16.msra.mxu0 %v1244
    %1300 = vmatmul.bf16.gmra.mxu0 %v107
    %v1301 = vpop.f32.mrf.mxu0
    %v1302 = vadd.f32 %v1158, %v1301
    %v1303 = vpop.f32.mrf.mxu0
    %1304 = vdwg.mxu0
    %1305 = vmatpush.bf16.msra.mxu0 %v1266
    %1306 = vmatpush.bf16.msra.mxu0 %v1263
    %1307 = vmatpush.bf16.msra.mxu0 %v1260
    %1308 = vmatpush.bf16.msra.mxu0 %v1257
    %1309 = vmatpush.bf16.msra.mxu0 %v1254
    %1310 = vmatpush.bf16.msra.mxu0 %v1251
    %1311 = vmatpush.bf16.msra.mxu0 %v1248
    %1312 = vmatpush.bf16.msra.mxu0 %v1245
    %1313 = vmatmul.bf16.gmra.mxu0 %v107
    %v1314 = vpop.f32.mrf.mxu0
    %v1315 = vadd.f32 %v1159, %v1314
    %v1316 = vpop.f32.mrf.mxu0
    %1317 = vdwg.mxu0
    %1318 = vmatpush.bf16.msra.mxu0 %v1267
    %1319 = vmatpush.bf16.msra.mxu0 %v1264
    %1320 = vmatpush.bf16.msra.mxu0 %v1261
    %1321 = vmatpush.bf16.msra.mxu0 %v1258
    %1322 = vmatpush.bf16.msra.mxu0 %v1255
    %1323 = vmatpush.bf16.msra.mxu0 %v1252
    %1324 = vmatpush.bf16.msra.mxu0 %v1249
    %1325 = vmatpush.bf16.msra.mxu0 %v1246
    %1326 = vmatmul.bf16.gmra.mxu0 %v107
    %v1327 = vpop.f32.mrf.mxu0
    %v1328 = vadd.f32 %v1160, %v1327
    %v1329 = vpop.f32.mrf.mxu0
    %1330 = vdwg.mxu0
    %v1331 = vadd.f32 %v1069, %v1302
    %v1332 = vxor.u32 %v1331, 2147483648
    %v1333 = vmul.f32 %v1332, 1.442695
    %v1334 = vpow.pop %v1333
    %v1335 = vadd.f32 %v1334, 1.0
    %v1336 = vrcp.pop %v1335
    %v1337 = vmul.f32 %v1335, %v1336
    %v1338 = vsub.f32 1.0, %v1337
    %v1339 = vmul.f32 %v1336, %v1338
    %v1340 = vadd.f32 %v1336, %v1339
    %vm1341 = vweird.f32 %v1335
    %vm1342 = vweird.f32 %v1336
    %vm1343 = vmor %vm1341, %vm1342
    %v1344 = vsel %vm1343, %v1336, %v1340
    %v1345 = vand.u32 2147483647, %v1335
    %vm1346 = vcmp.eq.f32.partialorder %v1345, 8.507059e+37
    %v1347 = vand.u32 %v1335, 2147483648
    %v1348 = vor.u32 1.1754944e-38, %v1347
    %v1349 = vsel %vm1346, %v1348, %v1344
    %v1350 = vmul.f32 1.0, %v1349
    %v1351 = vadd.f32 %v1095, %v1315
    %v1352 = vxor.u32 %v1351, 2147483648
    %v1353 = vmul.f32 %v1352, 1.442695
    %v1354 = vpow.pop %v1353
    %v1355 = vadd.f32 %v1354, 1.0
    %v1356 = vrcp.pop %v1355
    %v1357 = vmul.f32 %v1355, %v1356
    %v1358 = vsub.f32 1.0, %v1357
    %v1359 = vmul.f32 %v1356, %v1358
    %v1360 = vadd.f32 %v1356, %v1359
    %vm1361 = vweird.f32 %v1355
    %vm1362 = vweird.f32 %v1356
    %vm1363 = vmor %vm1361, %vm1362
    %v1364 = vsel %vm1363, %v1356, %v1360
    %v1365 = vand.u32 2147483647, %v1355
    %vm1366 = vcmp.eq.f32.partialorder %v1365, 8.507059e+37
    %v1367 = vand.u32 %v1355, 2147483648
    %v1368 = vor.u32 1.1754944e-38, %v1367
    %v1369 = vsel %vm1366, %v1368, %v1364
    %v1370 = vmul.f32 1.0, %v1369
    %v1371 = vmul.f32 %v1350, %v1328
    %v1372 = vadd.f32 %v1121, %v1371
    %v1373 = vtanh.pop %v1372
    %v1374 = vsub.f32 1.0, %v1370
    %v1375 = vmul.f32 %v1374, %v1373
    %v1376 = vmul.f32 %v1370, %v105
    %v1377 = vadd.f32 %v1375, %v1376
    %v1378 = vpack.c.bf16 %v1377, %v1377
    %v1379 = vld [vmem:[#allocation6] sm:$0xf]
    %v1380 = vld [vmem:[#allocation6 + $0x4] sm:$0xf]
    %v1381 = vld [vmem:[#allocation6 + $0x8] sm:$0xf]
    %v1382 = vld [vmem:[#allocation6 + $0xc] sm:$0xf]
    %v1383 = vld [vmem:[#allocation6 + $0x10] sm:$0xf]
    %v1384 = vld [vmem:[#allocation6 + $0x14] sm:$0xf]
    %v1385 = vld [vmem:[#allocation6 + $0x18] sm:$0xf]
    %v1386 = vld [vmem:[#allocation6 + $0x1c] sm:$0xf]
    %v1387 = vld [vmem:[#allocation6 + $0x20] sm:$0xf]
    %v1388 = vld [vmem:[#allocation6 + $0x24] sm:$0xf]
    %v1389 = vld [vmem:[#allocation6 + $0x28] sm:$0xf]
    %v1390 = vld [vmem:[#allocation6 + $0x2c] sm:$0xf]
    %v1391 = vld [vmem:[#allocation6 + $0x30] sm:$0xf]
    %v1392 = vld [vmem:[#allocation6 + $0x34] sm:$0xf]
    %v1393 = vld [vmem:[#allocation6 + $0x38] sm:$0xf]
    %v1394 = vld [vmem:[#allocation6 + $0x3c] sm:$0xf]
    %v1395 = vld [vmem:[#allocation6 + $0x40] sm:$0xf]
    %v1396 = vld [vmem:[#allocation6 + $0x44] sm:$0xf]
    %v1397 = vld [vmem:[#allocation6 + $0x48] sm:$0xf]
    %v1398 = vld [vmem:[#allocation6 + $0x4c] sm:$0xf]
    %v1399 = vld [vmem:[#allocation6 + $0x50] sm:$0xf]
    %v1400 = vld [vmem:[#allocation6 + $0x54] sm:$0xf]
    %v1401 = vld [vmem:[#allocation6 + $0x58] sm:$0xf]
    %v1402 = vld [vmem:[#allocation6 + $0x5c] sm:$0xf]
    %v1403 = vld [vmem:[#allocation6 + $0x60] sm:$0xf]
    %v1404 = vld [vmem:[#allocation6 + $0x64] sm:$0xf]
    %v1405 = vld [vmem:[#allocation6 + $0x68] sm:$0xf]
    %v1406 = vld [vmem:[#allocation6 + $0x6c] sm:$0xf]
    %v1407 = vld [vmem:[#allocation6 + $0x70] sm:$0xf]
    %v1408 = vld [vmem:[#allocation6 + $0x74] sm:$0xf]
    %v1409 = vld [vmem:[#allocation6 + $0x78] sm:$0xf]
    %v1410 = vld [vmem:[#allocation6 + $0x7c] sm:$0xf]
    %v1411 = vld [vmem:[#allocation6 + $0x80] sm:$0xf]
    %v1412 = vld [vmem:[#allocation6 + $0x84] sm:$0xf]
    %v1413 = vld [vmem:[#allocation6 + $0x88] sm:$0xf]
    %v1414 = vld [vmem:[#allocation6 + $0x8c] sm:$0xf]
    %v1415 = vld [vmem:[#allocation6 + $0x90] sm:$0xf]
    %v1416 = vld [vmem:[#allocation6 + $0x94] sm:$0xf]
    %v1417 = vld [vmem:[#allocation6 + $0x98] sm:$0xf]
    %v1418 = vld [vmem:[#allocation6 + $0x9c] sm:$0xf]
    %v1419 = vld [vmem:[#allocation6 + $0xa0] sm:$0xf]
    %v1420 = vld [vmem:[#allocation6 + $0xa4] sm:$0xf]
    %v1421 = vld [vmem:[#allocation6 + $0xa8] sm:$0xf]
    %v1422 = vld [vmem:[#allocation6 + $0xac] sm:$0xf]
    %v1423 = vld [vmem:[#allocation6 + $0xb0] sm:$0xf]
    %v1424 = vld [vmem:[#allocation6 + $0xb4] sm:$0xf]
    %v1425 = vld [vmem:[#allocation6 + $0xb8] sm:$0xf]
    %v1426 = vld [vmem:[#allocation6 + $0xbc] sm:$0xf]
    %v1427 = vld [vmem:[%s13] sm:$0x1]
    %v1429 = vperm.slane %v1427, 0
    %v1479 = vunpack.c.l.b16 %v1379
    %v1480 = vunpack.c.l.b16 %v1380
    %v1481 = vunpack.c.l.b16 %v1381
    %v1482 = vunpack.c.l.b16 %v1382
    %v1483 = vunpack.c.l.b16 %v1383
    %v1484 = vunpack.c.l.b16 %v1384
    %v1485 = vunpack.c.l.b16 %v1385
    %v1486 = vunpack.c.l.b16 %v1386
    %v1487 = vunpack.c.l.b16 %v1387
    %v1488 = vunpack.c.l.b16 %v1388
    %v1489 = vunpack.c.l.b16 %v1389
    %v1490 = vunpack.c.l.b16 %v1390
    %v1491 = vunpack.c.l.b16 %v1391
    %v1492 = vunpack.c.l.b16 %v1392
    %v1493 = vunpack.c.l.b16 %v1393
    %v1494 = vunpack.c.l.b16 %v1394
    %v1495 = vunpack.c.l.b16 %v1395
    %v1496 = vunpack.c.l.b16 %v1396
    %v1497 = vunpack.c.l.b16 %v1397
    %v1498 = vunpack.c.l.b16 %v1398
    %v1499 = vunpack.c.l.b16 %v1399
    %v1500 = vunpack.c.l.b16 %v1400
    %v1501 = vunpack.c.l.b16 %v1401
    %v1502 = vunpack.c.l.b16 %v1402
    %v1503 = vunpack.c.l.b16 %v1403
    %v1504 = vunpack.c.l.b16 %v1404
    %v1505 = vunpack.c.l.b16 %v1405
    %v1506 = vunpack.c.l.b16 %v1406
    %v1507 = vunpack.c.l.b16 %v1407
    %v1508 = vunpack.c.l.b16 %v1408
    %v1509 = vunpack.c.l.b16 %v1409
    %v1510 = vunpack.c.l.b16 %v1410
    %v1511 = vunpack.c.l.b16 %v1411
    %v1512 = vunpack.c.l.b16 %v1412
    %v1513 = vunpack.c.l.b16 %v1413
    %v1514 = vunpack.c.l.b16 %v1414
    %v1515 = vunpack.c.l.b16 %v1415
    %v1516 = vunpack.c.l.b16 %v1416
    %v1517 = vunpack.c.l.b16 %v1417
    %v1518 = vunpack.c.l.b16 %v1418
    %v1519 = vunpack.c.l.b16 %v1419
    %v1520 = vunpack.c.l.b16 %v1420
    %v1521 = vunpack.c.l.b16 %v1421
    %v1522 = vunpack.c.l.b16 %v1422
    %v1523 = vunpack.c.l.b16 %v1423
    %v1524 = vunpack.c.l.b16 %v1424
    %v1525 = vunpack.c.l.b16 %v1425
    %v1526 = vunpack.c.l.b16 %v1426
    %v1527 = vpack.c.b16 %v1480, %v1479
    %v1528 = vpack.c.b16 %v1482, %v1481
    %v1529 = vpack.c.b16 %v1484, %v1483
    %v1530 = vpack.c.b16 %v1486, %v1485
    %v1531 = vpack.c.b16 %v1488, %v1487
    %v1532 = vpack.c.b16 %v1490, %v1489
    %v1533 = vpack.c.b16 %v1492, %v1491
    %v1534 = vpack.c.b16 %v1494, %v1493
    %v1535 = vpack.c.b16 %v1496, %v1495
    %v1536 = vpack.c.b16 %v1498, %v1497
    %v1537 = vpack.c.b16 %v1500, %v1499
    %v1538 = vpack.c.b16 %v1502, %v1501
    %v1539 = vpack.c.b16 %v1504, %v1503
    %v1540 = vpack.c.b16 %v1506, %v1505
    %v1541 = vpack.c.b16 %v1508, %v1507
    %v1542 = vpack.c.b16 %v1510, %v1509
    %v1543 = vpack.c.b16 %v1512, %v1511
    %v1544 = vpack.c.b16 %v1514, %v1513
    %v1545 = vpack.c.b16 %v1516, %v1515
    %v1546 = vpack.c.b16 %v1518, %v1517
    %v1547 = vpack.c.b16 %v1520, %v1519
    %v1548 = vpack.c.b16 %v1522, %v1521
    %v1549 = vpack.c.b16 %v1524, %v1523
    %v1550 = vpack.c.b16 %v1526, %v1525
    %1575 = vmatpush.bf16.msra.mxu0 %v1534
    %1576 = vmatpush.bf16.msra.mxu0 %v1533
    %1577 = vmatpush.bf16.msra.mxu0 %v1532
    %1578 = vmatpush.bf16.msra.mxu0 %v1531
    %1579 = vmatpush.bf16.msra.mxu0 %v1530
    %1580 = vmatpush.bf16.msra.mxu0 %v1529
    %1581 = vmatpush.bf16.msra.mxu0 %v1528
    %1582 = vmatpush.bf16.msra.mxu0 %v1527
    %1583 = vmatmul.bf16.gmra.mxu0 %v1378
    %v1584 = vpop.f32.mrf.mxu0
    %v1585 = vadd.f32 %v1429, %v1584
    %v1586 = vpop.f32.mrf.mxu0
    %1587 = vdwg.mxu0
    %1588 = vmatpush.bf16.msra.mxu0 %v1542
    %1589 = vmatpush.bf16.msra.mxu0 %v1541
    %1590 = vmatpush.bf16.msra.mxu0 %v1540
    %1591 = vmatpush.bf16.msra.mxu0 %v1539
    %1592 = vmatpush.bf16.msra.mxu0 %v1538
    %1593 = vmatpush.bf16.msra.mxu0 %v1537
    %1594 = vmatpush.bf16.msra.mxu0 %v1536
    %1595 = vmatpush.bf16.msra.mxu0 %v1535
    %1596 = vmatmul.bf16.gmra.mxu0 %v716
    %v1597 = vpop.f32.mrf.mxu0
    %v1598 = vadd.f32 %v1585, %v1597
    %v1599 = vpop.f32.mrf.mxu0
    %1600 = vdwg.mxu0
    %1601 = vmatpush.bf16.msra.mxu0 %v1550
    %1602 = vmatpush.bf16.msra.mxu0 %v1549
    %1603 = vmatpush.bf16.msra.mxu0 %v1548
    %1604 = vmatpush.bf16.msra.mxu0 %v1547
    %1605 = vmatpush.bf16.msra.mxu0 %v1546
    %1606 = vmatpush.bf16.msra.mxu0 %v1545
    %1607 = vmatpush.bf16.msra.mxu0 %v1544
    %1608 = vmatpush.bf16.msra.mxu0 %v1543
    %1609 = vmatmul.bf16.gmra.mxu0 %v106
    %v1610 = vpop.f32.mrf.mxu0
    %v1611 = vadd.f32 %v1598, %v1610
    %v1612 = vpop.f32.mrf.mxu0
    %1613 = vdwg.mxu0
    %1614 = vmax.xlane.f32.xlu0 %v1611
    %v1615 = vpop.xlane.xlu0 %1614
    %v1616 = vsub.f32 %v1611, %v1615
    %v1617 = vmul.f32 %v1616, 1.442695
    %v1618 = vpow.pop %v1617
    %1619 = vadd.xlane.f32.xlu0 %v1618
    %v1620 = vpop.xlane.xlu0 %1619
    %v1621 = vrcp.pop %v1620
    %v1622 = vmul.f32 %v1620, %v1621
    %v1623 = vsub.f32 1.0, %v1622
    %v1624 = vmul.f32 %v1621, %v1623
    %v1625 = vadd.f32 %v1621, %v1624
    %vm1626 = vweird.f32 %v1620
    %vm1627 = vweird.f32 %v1621
    %vm1628 = vmor %vm1626, %vm1627
    %v1629 = vsel %vm1628, %v1621, %v1625
    %v1630 = vand.u32 2147483647, %v1620
    %vm1631 = vcmp.eq.f32.partialorder %v1630, 8.507059e+37
    %v1632 = vand.u32 %v1620, 2147483648
    %v1633 = vor.u32 1.1754944e-38, %v1632
    %v1634 = vsel %vm1631, %v1633, %v1629
    %v1635 = vmul.f32 %v1618, %v1634
    %1636 = vst [vmem:[%s14] sm:$0xff] %v1635
    %1637 = vst [vmem:[%s15] sm:$0xff] %v1377
    // Predicated region
    $region70: #{decoder_forward.1} parent=1 // pred_check
      _
    $region71: #{decoder_forward.1} parent=1 // pred_check_branch
      %1639 = sbr.rel (0) target = $region73
    $region72: #{decoder_forward.1} parent=1 // pred_region
      _
    $region73: #{decoder_forward.1} parent=1 // pred_fallthru
      _
    // Predicated region
    $region74: #{decoder_forward.1} parent=1 // pred_check
      _
    $region75: #{decoder_forward.1} parent=1 // pred_check_branch
      %1641 = sbr.rel (0) target = $region77
    $region76: #{decoder_forward.1} parent=1 // pred_region
      _
    $region77: #{decoder_forward.1} parent=1 // pred_fallthru
      _
    // Predicated region
    $region78: #{decoder_forward.1} parent=1 // pred_check
      _
    $region79: #{decoder_forward.1} parent=1 // pred_check_branch
      %1643 = sbr.rel (0) target = $region81
    $region80: #{decoder_forward.1} parent=1 // pred_region
      _
    $region81: #{decoder_forward.1} parent=1 // pred_fallthru
      _
    // Predicated region
    $region82: #{decoder_forward.1} parent=1 // pred_check
      _
    $region83: #{decoder_forward.1} parent=1 // pred_check_branch
      %1645 = sbr.rel (0) target = $region85
    $region84: #{decoder_forward.1} parent=1 // pred_region
      _
    $region85: #{decoder_forward.1} parent=1 // pred_fallthru
      _
    %1646 = vsyncpa [#allocation3], 1
    %1647 = vsyncpa [#allocation5], 1

</llo_original>
